<compile_context>
chip_gen: v7x
topology: tpu7x:2x2x1
jax: 0.10.0
libtpu: 0.0.40
codegen_flags: <defaults>
</compile_context>

<pallas_src>
import functools
import math

import numpy as np

import jax
import jax.numpy as jnp
from jax import lax
from jax.experimental import pallas as pl
from jax.experimental.pallas import tpu as pltpu


SLAB_WIDTH = 128  # lane width of the packed parameter slab


def _rup(n, m):
    return (n + m - 1) // m * m


# ----------------------------------------------------------------------------
# Parameters (PyTorch layouts) + one-time packing into a single VMEM slab
# ----------------------------------------------------------------------------

def init_params(key, input_channels, output_channels, list_channels,
                hidden_size, kernel_size, prediction_length):
    keys = iter(jax.random.split(key, 64))

    def nrm(shape, scale=0.05):
        return (scale * jax.random.normal(next(keys), shape)).astype(jnp.float32)

    p = {'sequence_weights': nrm((3,), 0.02)}
    blocks = []
    in_ch = input_channels
    for ch in list_channels:
        blk = {'conv1_w': nrm((ch, in_ch, kernel_size)), 'conv1_b': nrm((ch,)),
               'conv2_w': nrm((ch, ch, kernel_size)),    'conv2_b': nrm((ch,))}
        if in_ch != ch:                       # residual 1x1 downsample conv
            blk['down_w'] = nrm((ch, in_ch))
            blk['down_b'] = nrm((ch,))
        blocks.append(blk)
        in_ch = ch
    p['tcn_blocks'] = blocks
    p['tcn_fc1_w'] = nrm((hidden_size, list_channels[-1]))
    p['tcn_fc1_b'] = nrm((hidden_size,))
    p['tcn_fc2_w'] = nrm((output_channels, hidden_size))
    p['tcn_fc2_b'] = nrm((output_channels,))
    p['fc1_w'] = nrm((64, output_channels)); p['fc1_b'] = nrm((64,))
    p['fc2_w'] = nrm((64, 64));              p['fc2_b'] = nrm((64,))
    p['fc3_w'] = nrm((prediction_length * input_channels, 64))
    p['fc3_b'] = nrm((prediction_length * input_channels,))
    p['fc4_w'] = nrm((32, output_channels)); p['fc4_b'] = nrm((32,))
    p['fc5_w'] = nrm((3, 32));               p['fc5_b'] = nrm((3,))
    return p


def pack_params(params, kernel_size):
    """Pack every weight/bias into ONE (rows, 128) f32 slab (single DMA).

    Each layer occupies an 8-row-aligned block laid out as [W | b] so the
    kernel reads it with two static ref slices.  Conv weights are fused
    taps-in-columns: (C_out, K * Cp_in) with Cp_in = round_up(C_in, 8) and
    zero padding columns, matching the tap-staging scratch layout.
    """
    K = kernel_size
    entries, meta = [], {}
    row = 0

    def place(name, arr2d):
        nonlocal row
        arr2d = np.asarray(arr2d, np.float32)
        r, c = arr2d.shape
        assert c <= SLAB_WIDTH, f'{name}: width {c} > {SLAB_WIDTH}'
        meta[name] = (row, r, c)
        entries.append((row, arr2d))
        row += _rup(r, 8)

    place('seq', np.asarray(params['sequence_weights'], np.float32).reshape(1, 3))

    def fuse_conv(w, b, cin, cp):
        w = np.asarray(w, np.float32)               # (C_out, C_in, K)
        f = np.zeros((w.shape[0], K * cp + 1), np.float32)
        for k in range(K):
            f[:, k * cp:k * cp + cin] = w[:, :, k]
        f[:, K * cp] = np.asarray(b, np.float32)
        return f

    blocks_meta = []
    for i, blk in enumerate(params['tcn_blocks']):
        c_out, c_in, _ = blk['conv1_w'].shape
        cp_in, cp_mid = _rup(c_in, 8), _rup(c_out, 8)
        place(f'blk{i}_conv1', fuse_conv(blk['conv1_w'], blk['conv1_b'], c_in, cp_in))
        place(f'blk{i}_conv2', fuse_conv(blk['conv2_w'], blk['conv2_b'], c_out, cp_mid))
        has_down = 'down_w' in blk
        if has_down:
            dw = np.asarray(blk['down_w'], np.float32)
            db = np.asarray(blk['down_b'], np.float32)[:, None]
            place(f'blk{i}_down', np.concatenate([dw, db], axis=1))
        blocks_meta.append(dict(dilation=2 ** i, cin=c_in, cpin=cp_in,
                                cout=c_out, cpmid=cp_mid, down=has_down))
    meta['blocks'] = blocks_meta

    for name in ('tcn_fc1', 'tcn_fc2', 'fc1', 'fc2', 'fc3', 'fc4', 'fc5'):
        w = np.asarray(params[name + '_w'], np.float32)
        b = np.asarray(params[name + '_b'], np.float32)[:, None]
        place(name, np.concatenate([w, b], axis=1))

    slab = np.zeros((_rup(row, 8), SLAB_WIDTH), np.float32)
    for off, arr in entries:
        slab[off:off + arr.shape[0], :arr.shape[1]] = arr
    return jnp.asarray(slab), meta


# ----------------------------------------------------------------------------
# Fused forward kernel
# ----------------------------------------------------------------------------

def _make_kernel(meta, *, K, num_ch, B, B_pad):
    blocks = meta['blocks']

    def kernel(x_ref, slab_ref, tpos_ref, lastsel_ref, pred_ref, cls_ref, stage_ref):
        # Zero the tap-staging scratch once: never-written padding rows must be
        # exactly 0 (their weight columns are 0, but 0*garbage could be NaN if
        # uninitialized VMEM held Inf/NaN bit patterns).
        stage_ref[...] = jnp.zeros_like(stage_ref)

        tpos = tpos_ref[...]                                   # (1, BT_pad) f32
        # real-batch column mask for BatchNorm statistics (padded cols excluded)
        bmask = (lax.broadcasted_iota(jnp.int32, (1, B_pad), 1) < B
                 ).astype(jnp.float32)
        inv_b = 1.0 / float(B)

        def wb(name):
            off, r, c = meta[name]
            w = slab_ref[off:off + r, 0:c - 1]
            b = slab_ref[off:off + r, c - 1:c]
            return w, b

        def shift_mask(s):
            # zero-fill mask for a causal shift by s inside each length-T segment
            return (tpos >= float(s)).astype(jnp.float32)

        def conv(h, name, cin, cp, dilation):
            # Dilated causal conv as ONE MXU dot: stage K shifted copies of h
            # into the scratch (tap k at rows [k*cp, k*cp+cin)), shift each tap
            # block in place (8-row-aligned) with roll+mask, then contract K*cp.
            w, b = wb(name)                                    # (cout, K*cp), (cout, 1)
            for k in range(K):
                stage_ref[k * cp:k * cp + cin, :] = h
            for k in range(K):
                s = (K - 1 - k) * dilation
                if s > 0:
                    blk = stage_ref[k * cp:(k + 1) * cp, :]
                    blk = pltpu.roll(blk, shift=s, axis=1) * shift_mask(s)
                    stage_ref[k * cp:(k + 1) * cp, :] = blk
            taps = stage_ref[0:K * cp, :]                      # (K*cp, BT_pad)
            y = jnp.dot(w, taps, preferred_element_type=jnp.float32) + b
            return jnp.maximum(y, 0.0)

        def dense(x, name, relu=False, bn=False):
            # feature-major dense: x (F_in, B_pad), W (F_out, F_in), b (F_out, 1)
            w, b = wb(name)
            y = jnp.dot(w, x, preferred_element_type=jnp.float32) + b
            if relu:
                y = jnp.maximum(y, 0.0)
            if bn:
                # BatchNorm1d, training-mode batch stats, gamma=1 beta=0,
                # statistics masked to the real batch columns, clamped variance.
                s1 = jnp.sum(y * bmask, axis=1, keepdims=True)
                s2 = jnp.sum(y * y * bmask, axis=1, keepdims=True)
                mu = s1 * inv_b
                var = jnp.maximum(s2 * inv_b - mu * mu, 0.0)
                y = (y - mu) * lax.rsqrt(var + 1e-5)
            return y

        # ---- softmax of the 3 sequence weights, combine HbO / HbR / HbT groups
        soff = meta['seq'][0]
        sw = slab_ref[soff:soff + 1, 0:3]
        sw = sw - jnp.max(sw, axis=1, keepdims=True)
        e = jnp.exp(sw)
        w3 = e / jnp.sum(e, axis=1, keepdims=True)             # (1, 3)

        xc = x_ref[...]                                        # (3*num_ch, BT_pad)
        h = (w3[:, 0:1] * xc[0:num_ch, :]
             + w3[:, 1:2] * xc[num_ch:2 * num_ch, :]
             + w3[:, 2:3] * xc[2 * num_ch:3 * num_ch, :])      # (num_ch, BT_pad)

        # ---- TCN encoder (synthesized TemporalConvNet; dropout = identity)
        for i, bm in enumerate(blocks):
            d = bm['dilation']
            out = conv(h, f'blk{i}_conv1', bm['cin'], bm['cpin'], d)
            out = conv(out, f'blk{i}_conv2', bm['cout'], bm['cpmid'], d)
            if bm['down']:
                wd, bd = wb(f'blk{i}_down')
                res = jnp.dot(wd, h, preferred_element_type=jnp.float32) + bd
            else:
                res = h
            h = jnp.maximum(out + res, 0.0)

        # ---- last-time-step readout (tiny one-hot dot) -> encoder MLP
        emb = jnp.dot(h, lastsel_ref[...], preferred_element_type=jnp.float32)
        emb = dense(emb, 'tcn_fc1', relu=True)                 # Linear -> ReLU
        embedding = dense(emb, 'tcn_fc2')                      # Linear

        # ---- reconstruction head: fc1 -> ReLU -> bn64 -> fc2 -> ReLU -> bn64 -> fc3
        h1 = dense(embedding, 'fc1', relu=True, bn=True)
        h2 = dense(h1, 'fc2', relu=True, bn=True)
        pred = dense(h2, 'fc3')                                # (P*C, B_pad)

        # ---- classification head: fc4 -> ReLU -> bn32 -> fc5 -> softmax(dim=1)
        h4 = dense(embedding, 'fc4', relu=True, bn=True)
        logits = dense(h4, 'fc5')                              # (3, B_pad)
        m = jnp.max(logits, axis=0, keepdims=True)
        ez = jnp.exp(logits - m)
        cls = ez / jnp.sum(ez, axis=0, keepdims=True)

        pred_ref[...] = pred
        cls_ref[...] = cls

    return kernel


# ----------------------------------------------------------------------------
# Forward (single pallas_call)
# ----------------------------------------------------------------------------

def pretrain_model_forward(slab, x, *, meta, prediction_length, kernel_size):
    """x: (B, 3*input_channels, T) float32 (NCT layout, as in PyTorch)."""
    B, NC, T = x.shape
    C = NC // 3
    P = prediction_length

    # causal shift by prediction_length (torch: zeros-mask + concat); pure
    # input layout prep in the wrapper, fused by XLA with the fold below.
    x = jnp.concatenate([jnp.zeros((B, NC, P), x.dtype), x[:, :, :T - P]], axis=2)

    # lane-dense folded layout: (channels, B_pad*T) with B_pad*T % 128 == 0
    seg = 128 // math.gcd(T, 128)
    B_pad = _rup(B, seg)
    BT, BT_pad = B * T, B_pad * T

    x_cm = jnp.transpose(x, (1, 0, 2)).reshape(NC, BT)
    x_cm = jnp.pad(x_cm, ((0, 0), (0, BT_pad - BT)))

    # tiny trace-time constants: per-column time index + last-step one-hot
    tpos = np.tile(np.arange(T, dtype=np.float32), B_pad)[None, :]   # (1, BT_pad)
    lastsel = np.zeros((BT_pad, B_pad), np.float32)
    lastsel[np.arange(B_pad) * T + (T - 1), np.arange(B_pad)] = 1.0

    cp_max = max(max(bm['cpin'], bm['cpmid']) for bm in meta['blocks'])
    kernel = _make_kernel(meta, K=kernel_size, num_ch=C, B=B, B_pad=B_pad)

    vmem = pl.BlockSpec(memory_space=pltpu.MemorySpace.VMEM)
    pred_fm, cls_fm = pl.pallas_call(
        kernel,
        out_shape=(jax.ShapeDtypeStruct((P * C, B_pad), jnp.float32),
                   jax.ShapeDtypeStruct((3, B_pad), jnp.float32)),
        in_specs=[vmem, vmem, vmem, vmem],
        out_specs=(vmem, vmem),
        scratch_shapes=[pltpu.VMEM((kernel_size * cp_max, BT_pad), jnp.float32)],
    )(x_cm, slab, jnp.asarray(tpos), jnp.asarray(lastsel))

    # tiny output un-plumbing back to the PyTorch layout (drop padded batch cols)
    predicted_x = jnp.transpose(pred_fm[:, :B]).reshape(B, C, P)
    classification = jnp.transpose(cls_fm[:, :B])
    return predicted_x, classification


# ----------------------------------------------------------------------------
# Main
# ----------------------------------------------------------------------------

if __name__ == "__main__":
    key = jax.random.PRNGKey(0)
    pkey, xkey = jax.random.split(key)

    input_channels = 4          # per haemoglobin species
    output_channels = 16        # encoder embedding size
    list_channels = [8, 16]
    hidden_size = 32
    kernel_size = 3
    prediction_length = 4
    batch, seq_len = 2, 16

    params = init_params(pkey, input_channels, output_channels, list_channels,
                         hidden_size, kernel_size, prediction_length)
    slab, meta = pack_params(params, kernel_size)   # one-time weight packing

    x = jax.random.normal(xkey, (batch, 3 * input_channels, seq_len),
                          dtype=jnp.float32)

    forward = jax.jit(functools.partial(pretrain_model_forward, meta=meta,
                                        prediction_length=prediction_length,
                                        kernel_size=kernel_size))
    predicted_x, classification = forward(slab, x)
    jax.block_until_ready((predicted_x, classification))

    assert predicted_x.shape == (batch, input_channels, prediction_length)
    assert classification.shape == (batch, 3)
    assert bool(jnp.all(jnp.isfinite(predicted_x)))
    assert bool(jnp.allclose(jnp.sum(classification, axis=1), 1.0, atol=1e-5))
    print("KERNEL_OK")
</pallas_src>

<mosaic_0001>
module attributes {stable_mosaic.version = 11 : i64} {
  func.func @kernel(%arg0: memref<12x128xf32, #tpu.memory_space<vmem>>, %arg1: memref<312x128xf32, #tpu.memory_space<vmem>>, %arg2: memref<1x128xf32, #tpu.memory_space<vmem>>, %arg3: memref<128x8xf32, #tpu.memory_space<vmem>>, %arg4: memref<16x8xf32, #tpu.memory_space<vmem>>, %arg5: memref<3x8xf32, #tpu.memory_space<vmem>>, %arg6: memref<48x128xf32, #tpu.memory_space<vmem>>) attributes {dimension_semantics = [], scalar_prefetch = 0 : i64, scratch_operands = 1 : i64, tpu.core_type = #tpu.core_type<tc>} {
    %cst = arith.constant 0.000000e+00 : f32
    %0 = vector.broadcast %cst : f32 to vector<48x128xf32>
    %c0 = arith.constant 0 : index
    %c0_0 = arith.constant 0 : index
    %1 = vector.load %arg6[%c0, %c0_0] : memref<48x128xf32, #tpu.memory_space<vmem>>, vector<48x128xf32>
    tpu.vector_store %arg6[%c0, %c0_0], %0 {strides = array<i32>} : memref<48x128xf32, #tpu.memory_space<vmem>>, vector<48x128xf32>,
    %c0_1 = arith.constant 0 : index
    %c0_2 = arith.constant 0 : index
    %2 = vector.load %arg2[%c0_1, %c0_2] : memref<1x128xf32, #tpu.memory_space<vmem>>, vector<1x128xf32>
    %3 = tpu.iota {dimensions = array<i32: 1>} : vector<1x8xi32>
    %c2_i32 = arith.constant 2 : i32
    %4 = vector.broadcast %c2_i32 : i32 to vector<1x8xi32>
    %5 = arith.cmpi slt, %3, %4 : vector<1x8xi32>
    %6 = arith.extui %5 : vector<1x8xi1> to vector<1x8xi32>
    %7 = arith.sitofp %6 : vector<1x8xi32> to vector<1x8xf32>
    %c0_3 = arith.constant 0 : index
    %c0_4 = arith.constant 0 : index
    %8 = vector.load %arg1[%c0_3, %c0_4] : memref<312x128xf32, #tpu.memory_space<vmem>>, vector<1x3xf32>
    %cst_5 = arith.constant dense<0xFF800000> : vector<1xf32>
    %9 = vector.multi_reduction <maximumf>, %8, %cst_5 [1] : vector<1x3xf32> to vector<1xf32>
    %10 = vector.shape_cast %9 : vector<1xf32> to vector<1x1xf32>
    %11 = vector.broadcast %10 : vector<1x1xf32> to vector<1x3xf32>
    %12 = arith.subf %8, %11 : vector<1x3xf32>
    %13 = math.exp %12 : vector<1x3xf32>
    %cst_6 = arith.constant dense<0.000000e+00> : vector<1xf32>
    %14 = vector.multi_reduction <add>, %13, %cst_6 [1] : vector<1x3xf32> to vector<1xf32>
    %15 = vector.shape_cast %14 : vector<1xf32> to vector<1x1xf32>
    %16 = vector.broadcast %15 : vector<1x1xf32> to vector<1x3xf32>
    %17 = arith.divf %13, %16 : vector<1x3xf32>
    %c0_7 = arith.constant 0 : index
    %c0_8 = arith.constant 0 : index
    %18 = vector.load %arg0[%c0_7, %c0_8] : memref<12x128xf32, #tpu.memory_space<vmem>>, vector<12x128xf32>
    %19 = vector.extract_strided_slice %17 {offsets = [0, 0], sizes = [1, 1], strides = [1, 1]} : vector<1x3xf32> to vector<1x1xf32>
    %20 = vector.extract_strided_slice %18 {offsets = [0, 0], sizes = [4, 128], strides = [1, 1]} : vector<12x128xf32> to vector<4x128xf32>
    %21 = vector.broadcast %19 : vector<1x1xf32> to vector<4x128xf32>
    %22 = arith.mulf %21, %20 : vector<4x128xf32>
    %23 = vector.extract_strided_slice %17 {offsets = [0, 1], sizes = [1, 1], strides = [1, 1]} : vector<1x3xf32> to vector<1x1xf32>
    %24 = vector.extract_strided_slice %18 {offsets = [4, 0], sizes = [4, 128], strides = [1, 1]} : vector<12x128xf32> to vector<4x128xf32>
    %25 = vector.broadcast %23 : vector<1x1xf32> to vector<4x128xf32>
    %26 = arith.mulf %25, %24 : vector<4x128xf32>
    %27 = arith.addf %22, %26 : vector<4x128xf32>
    %28 = vector.extract_strided_slice %17 {offsets = [0, 2], sizes = [1, 1], strides = [1, 1]} : vector<1x3xf32> to vector<1x1xf32>
    %29 = vector.extract_strided_slice %18 {offsets = [8, 0], sizes = [4, 128], strides = [1, 1]} : vector<12x128xf32> to vector<4x128xf32>
    %30 = vector.broadcast %28 : vector<1x1xf32> to vector<4x128xf32>
    %31 = arith.mulf %30, %29 : vector<4x128xf32>
    %32 = arith.addf %27, %31 : vector<4x128xf32>
    %c8 = arith.constant 8 : index
    %c0_9 = arith.constant 0 : index
    %33 = vector.load %arg1[%c8, %c0_9] : memref<312x128xf32, #tpu.memory_space<vmem>>, vector<8x24xf32>
    %c8_10 = arith.constant 8 : index
    %c24 = arith.constant 24 : index
    %34 = vector.load %arg1[%c8_10, %c24] : memref<312x128xf32, #tpu.memory_space<vmem>>, vector<8x1xf32>
    %c0_11 = arith.constant 0 : index
    %c0_12 = arith.constant 0 : index
    %35 = vector.load %arg6[%c0_11, %c0_12] : memref<48x128xf32, #tpu.memory_space<vmem>>, vector<4x128xf32>
    tpu.vector_store %arg6[%c0_11, %c0_12], %32 {strides = array<i32>} : memref<48x128xf32, #tpu.memory_space<vmem>>, vector<4x128xf32>,
    %c8_13 = arith.constant 8 : index
    %c0_14 = arith.constant 0 : index
    %36 = vector.load %arg6[%c8_13, %c0_14] : memref<48x128xf32, #tpu.memory_space<vmem>>, vector<4x128xf32>
    tpu.vector_store %arg6[%c8_13, %c0_14], %32 {strides = array<i32>} : memref<48x128xf32, #tpu.memory_space<vmem>>, vector<4x128xf32>,
    %c16 = arith.constant 16 : index
    %c0_15 = arith.constant 0 : index
    %37 = vector.load %arg6[%c16, %c0_15] : memref<48x128xf32, #tpu.memory_space<vmem>>, vector<4x128xf32>
    tpu.vector_store %arg6[%c16, %c0_15], %32 {strides = array<i32>} : memref<48x128xf32, #tpu.memory_space<vmem>>, vector<4x128xf32>,
    %c0_16 = arith.constant 0 : index
    %c0_17 = arith.constant 0 : index
    %38 = vector.load %arg6[%c0_16, %c0_17] : memref<48x128xf32, #tpu.memory_space<vmem>>, vector<8x128xf32>
    %c2_i32_18 = arith.constant 2 : i32
    %39 = tpu.dynamic_rotate %38 by %c2_i32_18 dim 1 : vector<8x128xf32>, i32 -> vector<8x128xf32>
    %cst_19 = arith.constant 2.000000e+00 : f32
    %40 = vector.broadcast %cst_19 : f32 to vector<1x128xf32>
    %41 = arith.cmpf oge, %2, %40 : vector<1x128xf32>
    %42 = arith.extui %41 : vector<1x128xi1> to vector<1x128xi32>
    %43 = arith.sitofp %42 : vector<1x128xi32> to vector<1x128xf32>
    %44 = vector.broadcast %43 : vector<1x128xf32> to vector<8x128xf32>
    %45 = arith.mulf %39, %44 : vector<8x128xf32>
    %c0_20 = arith.constant 0 : index
    %c0_21 = arith.constant 0 : index
    %46 = vector.load %arg6[%c0_20, %c0_21] : memref<48x128xf32, #tpu.memory_space<vmem>>, vector<8x128xf32>
    tpu.vector_store %arg6[%c0_20, %c0_21], %45 {strides = array<i32>} : memref<48x128xf32, #tpu.memory_space<vmem>>, vector<8x128xf32>,
    %c8_22 = arith.constant 8 : index
    %c0_23 = arith.constant 0 : index
    %47 = vector.load %arg6[%c8_22, %c0_23] : memref<48x128xf32, #tpu.memory_space<vmem>>, vector<8x128xf32>
    %c1_i32 = arith.constant 1 : i32
    %48 = tpu.dynamic_rotate %47 by %c1_i32 dim 1 : vector<8x128xf32>, i32 -> vector<8x128xf32>
    %cst_24 = arith.constant 1.000000e+00 : f32
    %49 = vector.broadcast %cst_24 : f32 to vector<1x128xf32>
    %50 = arith.cmpf oge, %2, %49 : vector<1x128xf32>
    %51 = arith.extui %50 : vector<1x128xi1> to vector<1x128xi32>
    %52 = arith.sitofp %51 : vector<1x128xi32> to vector<1x128xf32>
    %53 = vector.broadcast %52 : vector<1x128xf32> to vector<8x128xf32>
    %54 = arith.mulf %48, %53 : vector<8x128xf32>
    %c8_25 = arith.constant 8 : index
    %c0_26 = arith.constant 0 : index
    %55 = vector.load %arg6[%c8_25, %c0_26] : memref<48x128xf32, #tpu.memory_space<vmem>>, vector<8x128xf32>
    tpu.vector_store %arg6[%c8_25, %c0_26], %54 {strides = array<i32>} : memref<48x128xf32, #tpu.memory_space<vmem>>, vector<8x128xf32>,
    %c0_27 = arith.constant 0 : index
    %c0_28 = arith.constant 0 : index
    %56 = vector.load %arg6[%c0_27, %c0_28] : memref<48x128xf32, #tpu.memory_space<vmem>>, vector<24x128xf32>
    %cst_29 = arith.constant dense<0.000000e+00> : vector<8x128xf32>
    %57 = tpu.matmul %33, %56, %cst_29 {dimension_numbers = #tpu.dot_dimension_numbers<[1], [0], [0], [1], [0, 0, 1, 1], [], []>} : vector<8x24xf32>, vector<24x128xf32>, vector<8x128xf32> -> vector<8x128xf32>
    %58 = vector.broadcast %34 : vector<8x1xf32> to vector<8x128xf32>
    %59 = arith.addf %57, %58 : vector<8x128xf32>
    %cst_30 = arith.constant 0.000000e+00 : f32
    %60 = vector.broadcast %cst_30 : f32 to vector<8x128xf32>
    %61 = arith.maximumf %59, %60 : vector<8x128xf32>
    %c16_31 = arith.constant 16 : index
    %c0_32 = arith.constant 0 : index
    %62 = vector.load %arg1[%c16_31, %c0_32] : memref<312x128xf32, #tpu.memory_space<vmem>>, vector<8x24xf32>
    %c16_33 = arith.constant 16 : index
    %c24_34 = arith.constant 24 : index
    %63 = vector.load %arg1[%c16_33, %c24_34] : memref<312x128xf32, #tpu.memory_space<vmem>>, vector<8x1xf32>
    %c0_35 = arith.constant 0 : index
    %c0_36 = arith.constant 0 : index
    %64 = vector.load %arg6[%c0_35, %c0_36] : memref<48x128xf32, #tpu.memory_space<vmem>>, vector<8x128xf32>
    tpu.vector_store %arg6[%c0_35, %c0_36], %61 {strides = array<i32>} : memref<48x128xf32, #tpu.memory_space<vmem>>, vector<8x128xf32>,
    %c8_37 = arith.constant 8 : index
    %c0_38 = arith.constant 0 : index
    %65 = vector.load %arg6[%c8_37, %c0_38] : memref<48x128xf32, #tpu.memory_space<vmem>>, vector<8x128xf32>
    tpu.vector_store %arg6[%c8_37, %c0_38], %61 {strides = array<i32>} : memref<48x128xf32, #tpu.memory_space<vmem>>, vector<8x128xf32>,
    %c16_39 = arith.constant 16 : index
    %c0_40 = arith.constant 0 : index
    %66 = vector.load %arg6[%c16_39, %c0_40] : memref<48x128xf32, #tpu.memory_space<vmem>>, vector<8x128xf32>
    tpu.vector_store %arg6[%c16_39, %c0_40], %61 {strides = array<i32>} : memref<48x128xf32, #tpu.memory_space<vmem>>, vector<8x128xf32>,
    %c0_41 = arith.constant 0 : index
    %c0_42 = arith.constant 0 : index
    %67 = vector.load %arg6[%c0_41, %c0_42] : memref<48x128xf32, #tpu.memory_space<vmem>>, vector<8x128xf32>
    %c2_i32_43 = arith.constant 2 : i32
    %68 = tpu.dynamic_rotate %67 by %c2_i32_43 dim 1 : vector<8x128xf32>, i32 -> vector<8x128xf32>
    %cst_44 = arith.constant 2.000000e+00 : f32
    %69 = vector.broadcast %cst_44 : f32 to vector<1x128xf32>
    %70 = arith.cmpf oge, %2, %69 : vector<1x128xf32>
    %71 = arith.extui %70 : vector<1x128xi1> to vector<1x128xi32>
    %72 = arith.sitofp %71 : vector<1x128xi32> to vector<1x128xf32>
    %73 = vector.broadcast %72 : vector<1x128xf32> to vector<8x128xf32>
    %74 = arith.mulf %68, %73 : vector<8x128xf32>
    %c0_45 = arith.constant 0 : index
    %c0_46 = arith.constant 0 : index
    %75 = vector.load %arg6[%c0_45, %c0_46] : memref<48x128xf32, #tpu.memory_space<vmem>>, vector<8x128xf32>
    tpu.vector_store %arg6[%c0_45, %c0_46], %74 {strides = array<i32>} : memref<48x128xf32, #tpu.memory_space<vmem>>, vector<8x128xf32>,
    %c8_47 = arith.constant 8 : index
    %c0_48 = arith.constant 0 : index
    %76 = vector.load %arg6[%c8_47, %c0_48] : memref<48x128xf32, #tpu.memory_space<vmem>>, vector<8x128xf32>
    %c1_i32_49 = arith.constant 1 : i32
    %77 = tpu.dynamic_rotate %76 by %c1_i32_49 dim 1 : vector<8x128xf32>, i32 -> vector<8x128xf32>
    %cst_50 = arith.constant 1.000000e+00 : f32
    %78 = vector.broadcast %cst_50 : f32 to vector<1x128xf32>
    %79 = arith.cmpf oge, %2, %78 : vector<1x128xf32>
    %80 = arith.extui %79 : vector<1x128xi1> to vector<1x128xi32>
    %81 = arith.sitofp %80 : vector<1x128xi32> to vector<1x128xf32>
    %82 = vector.broadcast %81 : vector<1x128xf32> to vector<8x128xf32>
    %83 = arith.mulf %77, %82 : vector<8x128xf32>
    %c8_51 = arith.constant 8 : index
    %c0_52 = arith.constant 0 : index
    %84 = vector.load %arg6[%c8_51, %c0_52] : memref<48x128xf32, #tpu.memory_space<vmem>>, vector<8x128xf32>
    tpu.vector_store %arg6[%c8_51, %c0_52], %83 {strides = array<i32>} : memref<48x128xf32, #tpu.memory_space<vmem>>, vector<8x128xf32>,
    %c0_53 = arith.constant 0 : index
    %c0_54 = arith.constant 0 : index
    %85 = vector.load %arg6[%c0_53, %c0_54] : memref<48x128xf32, #tpu.memory_space<vmem>>, vector<24x128xf32>
    %cst_55 = arith.constant dense<0.000000e+00> : vector<8x128xf32>
    %86 = tpu.matmul %62, %85, %cst_55 {dimension_numbers = #tpu.dot_dimension_numbers<[1], [0], [0], [1], [0, 0, 1, 1], [], []>} : vector<8x24xf32>, vector<24x128xf32>, vector<8x128xf32> -> vector<8x128xf32>
    %87 = vector.broadcast %63 : vector<8x1xf32> to vector<8x128xf32>
    %88 = arith.addf %86, %87 : vector<8x128xf32>
    %cst_56 = arith.constant 0.000000e+00 : f32
    %89 = vector.broadcast %cst_56 : f32 to vector<8x128xf32>
    %90 = arith.maximumf %88, %89 : vector<8x128xf32>
    %c24_57 = arith.constant 24 : index
    %c0_58 = arith.constant 0 : index
    %91 = vector.load %arg1[%c24_57, %c0_58] : memref<312x128xf32, #tpu.memory_space<vmem>>, vector<8x4xf32>
    %c24_59 = arith.constant 24 : index
    %c4 = arith.constant 4 : index
    %92 = vector.load %arg1[%c24_59, %c4] : memref<312x128xf32, #tpu.memory_space<vmem>>, vector<8x1xf32>
    %cst_60 = arith.constant dense<0.000000e+00> : vector<8x128xf32>
    %93 = tpu.matmul %91, %32, %cst_60 {dimension_numbers = #tpu.dot_dimension_numbers<[1], [0], [0], [1], [0, 0, 1, 1], [], []>} : vector<8x4xf32>, vector<4x128xf32>, vector<8x128xf32> -> vector<8x128xf32>
    %94 = vector.broadcast %92 : vector<8x1xf32> to vector<8x128xf32>
    %95 = arith.addf %93, %94 : vector<8x128xf32>
    %96 = arith.addf %90, %95 : vector<8x128xf32>
    %cst_61 = arith.constant 0.000000e+00 : f32
    %97 = vector.broadcast %cst_61 : f32 to vector<8x128xf32>
    %98 = arith.maximumf %96, %97 : vector<8x128xf32>
    %c32 = arith.constant 32 : index
    %c0_62 = arith.constant 0 : index
    %99 = vector.load %arg1[%c32, %c0_62] : memref<312x128xf32, #tpu.memory_space<vmem>>, vector<16x24xf32>
    %c32_63 = arith.constant 32 : index
    %c24_64 = arith.constant 24 : index
    %100 = vector.load %arg1[%c32_63, %c24_64] : memref<312x128xf32, #tpu.memory_space<vmem>>, vector<16x1xf32>
    %c0_65 = arith.constant 0 : index
    %c0_66 = arith.constant 0 : index
    %101 = vector.load %arg6[%c0_65, %c0_66] : memref<48x128xf32, #tpu.memory_space<vmem>>, vector<8x128xf32>
    tpu.vector_store %arg6[%c0_65, %c0_66], %98 {strides = array<i32>} : memref<48x128xf32, #tpu.memory_space<vmem>>, vector<8x128xf32>,
    %c8_67 = arith.constant 8 : index
    %c0_68 = arith.constant 0 : index
    %102 = vector.load %arg6[%c8_67, %c0_68] : memref<48x128xf32, #tpu.memory_space<vmem>>, vector<8x128xf32>
    tpu.vector_store %arg6[%c8_67, %c0_68], %98 {strides = array<i32>} : memref<48x128xf32, #tpu.memory_space<vmem>>, vector<8x128xf32>,
    %c16_69 = arith.constant 16 : index
    %c0_70 = arith.constant 0 : index
    %103 = vector.load %arg6[%c16_69, %c0_70] : memref<48x128xf32, #tpu.memory_space<vmem>>, vector<8x128xf32>
    tpu.vector_store %arg6[%c16_69, %c0_70], %98 {strides = array<i32>} : memref<48x128xf32, #tpu.memory_space<vmem>>, vector<8x128xf32>,
    %c0_71 = arith.constant 0 : index
    %c0_72 = arith.constant 0 : index
    %104 = vector.load %arg6[%c0_71, %c0_72] : memref<48x128xf32, #tpu.memory_space<vmem>>, vector<8x128xf32>
    %c4_i32 = arith.constant 4 : i32
    %105 = tpu.dynamic_rotate %104 by %c4_i32 dim 1 : vector<8x128xf32>, i32 -> vector<8x128xf32>
    %cst_73 = arith.constant 4.000000e+00 : f32
    %106 = vector.broadcast %cst_73 : f32 to vector<1x128xf32>
    %107 = arith.cmpf oge, %2, %106 : vector<1x128xf32>
    %108 = arith.extui %107 : vector<1x128xi1> to vector<1x128xi32>
    %109 = arith.sitofp %108 : vector<1x128xi32> to vector<1x128xf32>
    %110 = vector.broadcast %109 : vector<1x128xf32> to vector<8x128xf32>
    %111 = arith.mulf %105, %110 : vector<8x128xf32>
    %c0_74 = arith.constant 0 : index
    %c0_75 = arith.constant 0 : index
    %112 = vector.load %arg6[%c0_74, %c0_75] : memref<48x128xf32, #tpu.memory_space<vmem>>, vector<8x128xf32>
    tpu.vector_store %arg6[%c0_74, %c0_75], %111 {strides = array<i32>} : memref<48x128xf32, #tpu.memory_space<vmem>>, vector<8x128xf32>,
    %c8_76 = arith.constant 8 : index
    %c0_77 = arith.constant 0 : index
    %113 = vector.load %arg6[%c8_76, %c0_77] : memref<48x128xf32, #tpu.memory_space<vmem>>, vector<8x128xf32>
    %c2_i32_78 = arith.constant 2 : i32
    %114 = tpu.dynamic_rotate %113 by %c2_i32_78 dim 1 : vector<8x128xf32>, i32 -> vector<8x128xf32>
    %cst_79 = arith.constant 2.000000e+00 : f32
    %115 = vector.broadcast %cst_79 : f32 to vector<1x128xf32>
    %116 = arith.cmpf oge, %2, %115 : vector<1x128xf32>
    %117 = arith.extui %116 : vector<1x128xi1> to vector<1x128xi32>
    %118 = arith.sitofp %117 : vector<1x128xi32> to vector<1x128xf32>
    %119 = vector.broadcast %118 : vector<1x128xf32> to vector<8x128xf32>
    %120 = arith.mulf %114, %119 : vector<8x128xf32>
    %c8_80 = arith.constant 8 : index
    %c0_81 = arith.constant 0 : index
    %121 = vector.load %arg6[%c8_80, %c0_81] : memref<48x128xf32, #tpu.memory_space<vmem>>, vector<8x128xf32>
    tpu.vector_store %arg6[%c8_80, %c0_81], %120 {strides = array<i32>} : memref<48x128xf32, #tpu.memory_space<vmem>>, vector<8x128xf32>,
    %c0_82 = arith.constant 0 : index
    %c0_83 = arith.constant 0 : index
    %122 = vector.load %arg6[%c0_82, %c0_83] : memref<48x128xf32, #tpu.memory_space<vmem>>, vector<24x128xf32>
    %cst_84 = arith.constant dense<0.000000e+00> : vector<16x128xf32>
    %123 = tpu.matmul %99, %122, %cst_84 {dimension_numbers = #tpu.dot_dimension_numbers<[1], [0], [0], [1], [0, 0, 1, 1], [], []>} : vector<16x24xf32>, vector<24x128xf32>, vector<16x128xf32> -> vector<16x128xf32>
    %124 = vector.broadcast %100 : vector<16x1xf32> to vector<16x128xf32>
    %125 = arith.addf %123, %124 : vector<16x128xf32>
    %cst_85 = arith.constant 0.000000e+00 : f32
    %126 = vector.broadcast %cst_85 : f32 to vector<16x128xf32>
    %127 = arith.maximumf %125, %126 : vector<16x128xf32>
    %c48 = arith.constant 48 : index
    %c0_86 = arith.constant 0 : index
    %128 = vector.load %arg1[%c48, %c0_86] : memref<312x128xf32, #tpu.memory_space<vmem>>, vector<16x48xf32>
    %c48_87 = arith.constant 48 : index
    %c48_88 = arith.constant 48 : index
    %129 = vector.load %arg1[%c48_87, %c48_88] : memref<312x128xf32, #tpu.memory_space<vmem>>, vector<16x1xf32>
    %c0_89 = arith.constant 0 : index
    %c0_90 = arith.constant 0 : index
    %130 = vector.load %arg6[%c0_89, %c0_90] : memref<48x128xf32, #tpu.memory_space<vmem>>, vector<16x128xf32>
    tpu.vector_store %arg6[%c0_89, %c0_90], %127 {strides = array<i32>} : memref<48x128xf32, #tpu.memory_space<vmem>>, vector<16x128xf32>,
    %c16_91 = arith.constant 16 : index
    %c0_92 = arith.constant 0 : index
    %131 = vector.load %arg6[%c16_91, %c0_92] : memref<48x128xf32, #tpu.memory_space<vmem>>, vector<16x128xf32>
    tpu.vector_store %arg6[%c16_91, %c0_92], %127 {strides = array<i32>} : memref<48x128xf32, #tpu.memory_space<vmem>>, vector<16x128xf32>,
    %c32_93 = arith.constant 32 : index
    %c0_94 = arith.constant 0 : index
    %132 = vector.load %arg6[%c32_93, %c0_94] : memref<48x128xf32, #tpu.memory_space<vmem>>, vector<16x128xf32>
    tpu.vector_store %arg6[%c32_93, %c0_94], %127 {strides = array<i32>} : memref<48x128xf32, #tpu.memory_space<vmem>>, vector<16x128xf32>,
    %c0_95 = arith.constant 0 : index
    %c0_96 = arith.constant 0 : index
    %133 = vector.load %arg6[%c0_95, %c0_96] : memref<48x128xf32, #tpu.memory_space<vmem>>, vector<16x128xf32>
    %c4_i32_97 = arith.constant 4 : i32
    %134 = tpu.dynamic_rotate %133 by %c4_i32_97 dim 1 : vector<16x128xf32>, i32 -> vector<16x128xf32>
    %cst_98 = arith.constant 4.000000e+00 : f32
    %135 = vector.broadcast %cst_98 : f32 to vector<1x128xf32>
    %136 = arith.cmpf oge, %2, %135 : vector<1x128xf32>
    %137 = arith.extui %136 : vector<1x128xi1> to vector<1x128xi32>
    %138 = arith.sitofp %137 : vector<1x128xi32> to vector<1x128xf32>
    %139 = vector.broadcast %138 : vector<1x128xf32> to vector<16x128xf32>
    %140 = arith.mulf %134, %139 : vector<16x128xf32>
    %c0_99 = arith.constant 0 : index
    %c0_100 = arith.constant 0 : index
    %141 = vector.load %arg6[%c0_99, %c0_100] : memref<48x128xf32, #tpu.memory_space<vmem>>, vector<16x128xf32>
    tpu.vector_store %arg6[%c0_99, %c0_100], %140 {strides = array<i32>} : memref<48x128xf32, #tpu.memory_space<vmem>>, vector<16x128xf32>,
    %c16_101 = arith.constant 16 : index
    %c0_102 = arith.constant 0 : index
    %142 = vector.load %arg6[%c16_101, %c0_102] : memref<48x128xf32, #tpu.memory_space<vmem>>, vector<16x128xf32>
    %c2_i32_103 = arith.constant 2 : i32
    %143 = tpu.dynamic_rotate %142 by %c2_i32_103 dim 1 : vector<16x128xf32>, i32 -> vector<16x128xf32>
    %cst_104 = arith.constant 2.000000e+00 : f32
    %144 = vector.broadcast %cst_104 : f32 to vector<1x128xf32>
    %145 = arith.cmpf oge, %2, %144 : vector<1x128xf32>
    %146 = arith.extui %145 : vector<1x128xi1> to vector<1x128xi32>
    %147 = arith.sitofp %146 : vector<1x128xi32> to vector<1x128xf32>
    %148 = vector.broadcast %147 : vector<1x128xf32> to vector<16x128xf32>
    %149 = arith.mulf %143, %148 : vector<16x128xf32>
    %c16_105 = arith.constant 16 : index
    %c0_106 = arith.constant 0 : index
    %150 = vector.load %arg6[%c16_105, %c0_106] : memref<48x128xf32, #tpu.memory_space<vmem>>, vector<16x128xf32>
    tpu.vector_store %arg6[%c16_105, %c0_106], %149 {strides = array<i32>} : memref<48x128xf32, #tpu.memory_space<vmem>>, vector<16x128xf32>,
    %c0_107 = arith.constant 0 : index
    %c0_108 = arith.constant 0 : index
    %151 = vector.load %arg6[%c0_107, %c0_108] : memref<48x128xf32, #tpu.memory_space<vmem>>, vector<48x128xf32>
    %cst_109 = arith.constant dense<0.000000e+00> : vector<16x128xf32>
    %152 = tpu.matmul %128, %151, %cst_109 {dimension_numbers = #tpu.dot_dimension_numbers<[1], [0], [0], [1], [0, 0, 1, 1], [], []>} : vector<16x48xf32>, vector<48x128xf32>, vector<16x128xf32> -> vector<16x128xf32>
    %153 = vector.broadcast %129 : vector<16x1xf32> to vector<16x128xf32>
    %154 = arith.addf %152, %153 : vector<16x128xf32>
    %cst_110 = arith.constant 0.000000e+00 : f32
    %155 = vector.broadcast %cst_110 : f32 to vector<16x128xf32>
    %156 = arith.maximumf %154, %155 : vector<16x128xf32>
    %c64 = arith.constant 64 : index
    %c0_111 = arith.constant 0 : index
    %157 = vector.load %arg1[%c64, %c0_111] : memref<312x128xf32, #tpu.memory_space<vmem>>, vector<16x8xf32>
    %c64_112 = arith.constant 64 : index
    %c8_113 = arith.constant 8 : index
    %158 = vector.load %arg1[%c64_112, %c8_113] : memref<312x128xf32, #tpu.memory_space<vmem>>, vector<16x1xf32>
    %cst_114 = arith.constant dense<0.000000e+00> : vector<16x128xf32>
    %159 = tpu.matmul %157, %98, %cst_114 {dimension_numbers = #tpu.dot_dimension_numbers<[1], [0], [0], [1], [0, 0, 1, 1], [], []>} : vector<16x8xf32>, vector<8x128xf32>, vector<16x128xf32> -> vector<16x128xf32>
    %160 = vector.broadcast %158 : vector<16x1xf32> to vector<16x128xf32>
    %161 = arith.addf %159, %160 : vector<16x128xf32>
    %162 = arith.addf %156, %161 : vector<16x128xf32>
    %cst_115 = arith.constant 0.000000e+00 : f32
    %163 = vector.broadcast %cst_115 : f32 to vector<16x128xf32>
    %164 = arith.maximumf %162, %163 : vector<16x128xf32>
    %c0_116 = arith.constant 0 : index
    %c0_117 = arith.constant 0 : index
    %165 = vector.load %arg3[%c0_116, %c0_117] : memref<128x8xf32, #tpu.memory_space<vmem>>, vector<128x8xf32>
    %cst_118 = arith.constant dense<0.000000e+00> : vector<16x8xf32>
    %166 = tpu.matmul %164, %165, %cst_118 {dimension_numbers = #tpu.dot_dimension_numbers<[1], [0], [0], [1], [0, 0, 1, 1], [], []>} : vector<16x128xf32>, vector<128x8xf32>, vector<16x8xf32> -> vector<16x8xf32>
    %c80 = arith.constant 80 : index
    %c0_119 = arith.constant 0 : index
    %167 = vector.load %arg1[%c80, %c0_119] : memref<312x128xf32, #tpu.memory_space<vmem>>, vector<32x16xf32>
    %c80_120 = arith.constant 80 : index
    %c16_121 = arith.constant 16 : index
    %168 = vector.load %arg1[%c80_120, %c16_121] : memref<312x128xf32, #tpu.memory_space<vmem>>, vector<32x1xf32>
    %cst_122 = arith.constant dense<0.000000e+00> : vector<32x8xf32>
    %169 = tpu.matmul %167, %166, %cst_122 {dimension_numbers = #tpu.dot_dimension_numbers<[1], [0], [0], [1], [0, 0, 1, 1], [], []>} : vector<32x16xf32>, vector<16x8xf32>, vector<32x8xf32> -> vector<32x8xf32>
    %170 = vector.broadcast %168 : vector<32x1xf32> to vector<32x8xf32>
    %171 = arith.addf %169, %170 : vector<32x8xf32>
    %cst_123 = arith.constant 0.000000e+00 : f32
    %172 = vector.broadcast %cst_123 : f32 to vector<32x8xf32>
    %173 = arith.maximumf %171, %172 : vector<32x8xf32>
    %c112 = arith.constant 112 : index
    %c0_124 = arith.constant 0 : index
    %174 = vector.load %arg1[%c112, %c0_124] : memref<312x128xf32, #tpu.memory_space<vmem>>, vector<16x32xf32>
    %c112_125 = arith.constant 112 : index
    %c32_126 = arith.constant 32 : index
    %175 = vector.load %arg1[%c112_125, %c32_126] : memref<312x128xf32, #tpu.memory_space<vmem>>, vector<16x1xf32>
    %cst_127 = arith.constant dense<0.000000e+00> : vector<16x8xf32>
    %176 = tpu.matmul %174, %173, %cst_127 {dimension_numbers = #tpu.dot_dimension_numbers<[1], [0], [0], [1], [0, 0, 1, 1], [], []>} : vector<16x32xf32>, vector<32x8xf32>, vector<16x8xf32> -> vector<16x8xf32>
    %177 = vector.broadcast %175 : vector<16x1xf32> to vector<16x8xf32>
    %178 = arith.addf %176, %177 : vector<16x8xf32>
    %c128 = arith.constant 128 : index
    %c0_128 = arith.constant 0 : index
    %179 = vector.load %arg1[%c128, %c0_128] : memref<312x128xf32, #tpu.memory_space<vmem>>, vector<64x16xf32>
    %c128_129 = arith.constant 128 : index
    %c16_130 = arith.constant 16 : index
    %180 = vector.load %arg1[%c128_129, %c16_130] : memref<312x128xf32, #tpu.memory_space<vmem>>, vector<64x1xf32>
    %cst_131 = arith.constant dense<0.000000e+00> : vector<64x8xf32>
    %181 = tpu.matmul %179, %178, %cst_131 {dimension_numbers = #tpu.dot_dimension_numbers<[1], [0], [0], [1], [0, 0, 1, 1], [], []>} : vector<64x16xf32>, vector<16x8xf32>, vector<64x8xf32> -> vector<64x8xf32>
    %182 = vector.broadcast %180 : vector<64x1xf32> to vector<64x8xf32>
    %183 = arith.addf %181, %182 : vector<64x8xf32>
    %cst_132 = arith.constant 0.000000e+00 : f32
    %184 = vector.broadcast %cst_132 : f32 to vector<64x8xf32>
    %185 = arith.maximumf %183, %184 : vector<64x8xf32>
    %186 = vector.broadcast %7 : vector<1x8xf32> to vector<64x8xf32>
    %187 = arith.mulf %185, %186 : vector<64x8xf32>
    %cst_133 = arith.constant dense<0.000000e+00> : vector<64xf32>
    %188 = vector.multi_reduction <add>, %187, %cst_133 [1] : vector<64x8xf32> to vector<64xf32>
    %189 = vector.shape_cast %188 : vector<64xf32> to vector<64x1xf32>
    %190 = arith.mulf %185, %185 : vector<64x8xf32>
    %191 = vector.broadcast %7 : vector<1x8xf32> to vector<64x8xf32>
    %192 = arith.mulf %190, %191 : vector<64x8xf32>
    %cst_134 = arith.constant dense<0.000000e+00> : vector<64xf32>
    %193 = vector.multi_reduction <add>, %192, %cst_134 [1] : vector<64x8xf32> to vector<64xf32>
    %194 = vector.shape_cast %193 : vector<64xf32> to vector<64x1xf32>
    %cst_135 = arith.constant 5.000000e-01 : f32
    %195 = vector.broadcast %cst_135 : f32 to vector<64x1xf32>
    %196 = arith.mulf %189, %195 : vector<64x1xf32>
    %cst_136 = arith.constant 5.000000e-01 : f32
    %197 = vector.broadcast %cst_136 : f32 to vector<64x1xf32>
    %198 = arith.mulf %194, %197 : vector<64x1xf32>
    %199 = arith.mulf %196, %196 : vector<64x1xf32>
    %200 = arith.subf %198, %199 : vector<64x1xf32>
    %cst_137 = arith.constant 0.000000e+00 : f32
    %201 = vector.broadcast %cst_137 : f32 to vector<64x1xf32>
    %202 = arith.maximumf %200, %201 : vector<64x1xf32>
    %203 = vector.broadcast %196 : vector<64x1xf32> to vector<64x8xf32>
    %204 = arith.subf %185, %203 : vector<64x8xf32>
    %cst_138 = arith.constant 9.99999974E-6 : f32
    %205 = vector.broadcast %cst_138 : f32 to vector<64x1xf32>
    %206 = arith.addf %202, %205 : vector<64x1xf32>
    %207 = math.rsqrt %206 : vector<64x1xf32>
    %208 = vector.broadcast %207 : vector<64x1xf32> to vector<64x8xf32>
    %209 = arith.mulf %204, %208 : vector<64x8xf32>
    %c192 = arith.constant 192 : index
    %c0_139 = arith.constant 0 : index
    %210 = vector.load %arg1[%c192, %c0_139] : memref<312x128xf32, #tpu.memory_space<vmem>>, vector<64x64xf32>
    %c192_140 = arith.constant 192 : index
    %c64_141 = arith.constant 64 : index
    %211 = vector.load %arg1[%c192_140, %c64_141] : memref<312x128xf32, #tpu.memory_space<vmem>>, vector<64x1xf32>
    %cst_142 = arith.constant dense<0.000000e+00> : vector<64x8xf32>
    %212 = tpu.matmul %210, %209, %cst_142 {dimension_numbers = #tpu.dot_dimension_numbers<[1], [0], [0], [1], [0, 0, 1, 1], [], []>} : vector<64x64xf32>, vector<64x8xf32>, vector<64x8xf32> -> vector<64x8xf32>
    %213 = vector.broadcast %211 : vector<64x1xf32> to vector<64x8xf32>
    %214 = arith.addf %212, %213 : vector<64x8xf32>
    %cst_143 = arith.constant 0.000000e+00 : f32
    %215 = vector.broadcast %cst_143 : f32 to vector<64x8xf32>
    %216 = arith.maximumf %214, %215 : vector<64x8xf32>
    %217 = vector.broadcast %7 : vector<1x8xf32> to vector<64x8xf32>
    %218 = arith.mulf %216, %217 : vector<64x8xf32>
    %cst_144 = arith.constant dense<0.000000e+00> : vector<64xf32>
    %219 = vector.multi_reduction <add>, %218, %cst_144 [1] : vector<64x8xf32> to vector<64xf32>
    %220 = vector.shape_cast %219 : vector<64xf32> to vector<64x1xf32>
    %221 = arith.mulf %216, %216 : vector<64x8xf32>
    %222 = vector.broadcast %7 : vector<1x8xf32> to vector<64x8xf32>
    %223 = arith.mulf %221, %222 : vector<64x8xf32>
    %cst_145 = arith.constant dense<0.000000e+00> : vector<64xf32>
    %224 = vector.multi_reduction <add>, %223, %cst_145 [1] : vector<64x8xf32> to vector<64xf32>
    %225 = vector.shape_cast %224 : vector<64xf32> to vector<64x1xf32>
    %cst_146 = arith.constant 5.000000e-01 : f32
    %226 = vector.broadcast %cst_146 : f32 to vector<64x1xf32>
    %227 = arith.mulf %220, %226 : vector<64x1xf32>
    %cst_147 = arith.constant 5.000000e-01 : f32
    %228 = vector.broadcast %cst_147 : f32 to vector<64x1xf32>
    %229 = arith.mulf %225, %228 : vector<64x1xf32>
    %230 = arith.mulf %227, %227 : vector<64x1xf32>
    %231 = arith.subf %229, %230 : vector<64x1xf32>
    %cst_148 = arith.constant 0.000000e+00 : f32
    %232 = vector.broadcast %cst_148 : f32 to vector<64x1xf32>
    %233 = arith.maximumf %231, %232 : vector<64x1xf32>
    %234 = vector.broadcast %227 : vector<64x1xf32> to vector<64x8xf32>
    %235 = arith.subf %216, %234 : vector<64x8xf32>
    %cst_149 = arith.constant 9.99999974E-6 : f32
    %236 = vector.broadcast %cst_149 : f32 to vector<64x1xf32>
    %237 = arith.addf %233, %236 : vector<64x1xf32>
    %238 = math.rsqrt %237 : vector<64x1xf32>
    %239 = vector.broadcast %238 : vector<64x1xf32> to vector<64x8xf32>
    %240 = arith.mulf %235, %239 : vector<64x8xf32>
    %c256 = arith.constant 256 : index
    %c0_150 = arith.constant 0 : index
    %241 = vector.load %arg1[%c256, %c0_150] : memref<312x128xf32, #tpu.memory_space<vmem>>, vector<16x64xf32>
    %c256_151 = arith.constant 256 : index
    %c64_152 = arith.constant 64 : index
    %242 = vector.load %arg1[%c256_151, %c64_152] : memref<312x128xf32, #tpu.memory_space<vmem>>, vector<16x1xf32>
    %cst_153 = arith.constant dense<0.000000e+00> : vector<16x8xf32>
    %243 = tpu.matmul %241, %240, %cst_153 {dimension_numbers = #tpu.dot_dimension_numbers<[1], [0], [0], [1], [0, 0, 1, 1], [], []>} : vector<16x64xf32>, vector<64x8xf32>, vector<16x8xf32> -> vector<16x8xf32>
    %244 = vector.broadcast %242 : vector<16x1xf32> to vector<16x8xf32>
    %245 = arith.addf %243, %244 : vector<16x8xf32>
    %c272 = arith.constant 272 : index
    %c0_154 = arith.constant 0 : index
    %246 = vector.load %arg1[%c272, %c0_154] : memref<312x128xf32, #tpu.memory_space<vmem>>, vector<32x16xf32>
    %c272_155 = arith.constant 272 : index
    %c16_156 = arith.constant 16 : index
    %247 = vector.load %arg1[%c272_155, %c16_156] : memref<312x128xf32, #tpu.memory_space<vmem>>, vector<32x1xf32>
    %cst_157 = arith.constant dense<0.000000e+00> : vector<32x8xf32>
    %248 = tpu.matmul %246, %178, %cst_157 {dimension_numbers = #tpu.dot_dimension_numbers<[1], [0], [0], [1], [0, 0, 1, 1], [], []>} : vector<32x16xf32>, vector<16x8xf32>, vector<32x8xf32> -> vector<32x8xf32>
    %249 = vector.broadcast %247 : vector<32x1xf32> to vector<32x8xf32>
    %250 = arith.addf %248, %249 : vector<32x8xf32>
    %cst_158 = arith.constant 0.000000e+00 : f32
    %251 = vector.broadcast %cst_158 : f32 to vector<32x8xf32>
    %252 = arith.maximumf %250, %251 : vector<32x8xf32>
    %253 = vector.broadcast %7 : vector<1x8xf32> to vector<32x8xf32>
    %254 = arith.mulf %252, %253 : vector<32x8xf32>
    %cst_159 = arith.constant dense<0.000000e+00> : vector<32xf32>
    %255 = vector.multi_reduction <add>, %254, %cst_159 [1] : vector<32x8xf32> to vector<32xf32>
    %256 = vector.shape_cast %255 : vector<32xf32> to vector<32x1xf32>
    %257 = arith.mulf %252, %252 : vector<32x8xf32>
    %258 = vector.broadcast %7 : vector<1x8xf32> to vector<32x8xf32>
    %259 = arith.mulf %257, %258 : vector<32x8xf32>
    %cst_160 = arith.constant dense<0.000000e+00> : vector<32xf32>
    %260 = vector.multi_reduction <add>, %259, %cst_160 [1] : vector<32x8xf32> to vector<32xf32>
    %261 = vector.shape_cast %260 : vector<32xf32> to vector<32x1xf32>
    %cst_161 = arith.constant 5.000000e-01 : f32
    %262 = vector.broadcast %cst_161 : f32 to vector<32x1xf32>
    %263 = arith.mulf %256, %262 : vector<32x1xf32>
    %cst_162 = arith.constant 5.000000e-01 : f32
    %264 = vector.broadcast %cst_162 : f32 to vector<32x1xf32>
    %265 = arith.mulf %261, %264 : vector<32x1xf32>
    %266 = arith.mulf %263, %263 : vector<32x1xf32>
    %267 = arith.subf %265, %266 : vector<32x1xf32>
    %cst_163 = arith.constant 0.000000e+00 : f32
    %268 = vector.broadcast %cst_163 : f32 to vector<32x1xf32>
    %269 = arith.maximumf %267, %268 : vector<32x1xf32>
    %270 = vector.broadcast %263 : vector<32x1xf32> to vector<32x8xf32>
    %271 = arith.subf %252, %270 : vector<32x8xf32>
    %cst_164 = arith.constant 9.99999974E-6 : f32
    %272 = vector.broadcast %cst_164 : f32 to vector<32x1xf32>
    %273 = arith.addf %269, %272 : vector<32x1xf32>
    %274 = math.rsqrt %273 : vector<32x1xf32>
    %275 = vector.broadcast %274 : vector<32x1xf32> to vector<32x8xf32>
    %276 = arith.mulf %271, %275 : vector<32x8xf32>
    %c304 = arith.constant 304 : index
    %c0_165 = arith.constant 0 : index
    %277 = vector.load %arg1[%c304, %c0_165] : memref<312x128xf32, #tpu.memory_space<vmem>>, vector<3x32xf32>
    %c304_166 = arith.constant 304 : index
    %c32_167 = arith.constant 32 : index
    %278 = vector.load %arg1[%c304_166, %c32_167] : memref<312x128xf32, #tpu.memory_space<vmem>>, vector<3x1xf32>
    %cst_168 = arith.constant dense<0.000000e+00> : vector<3x8xf32>
    %279 = tpu.matmul %277, %276, %cst_168 {dimension_numbers = #tpu.dot_dimension_numbers<[1], [0], [0], [1], [0, 0, 1, 1], [], []>} : vector<3x32xf32>, vector<32x8xf32>, vector<3x8xf32> -> vector<3x8xf32>
    %280 = vector.broadcast %278 : vector<3x1xf32> to vector<3x8xf32>
    %281 = arith.addf %279, %280 : vector<3x8xf32>
    %cst_169 = arith.constant dense<0xFF800000> : vector<8xf32>
    %282 = vector.multi_reduction <maximumf>, %281, %cst_169 [0] : vector<3x8xf32> to vector<8xf32>
    %283 = vector.shape_cast %282 : vector<8xf32> to vector<1x8xf32>
    %284 = vector.broadcast %283 : vector<1x8xf32> to vector<3x8xf32>
    %285 = arith.subf %281, %284 : vector<3x8xf32>
    %286 = math.exp %285 : vector<3x8xf32>
    %cst_170 = arith.constant dense<0.000000e+00> : vector<8xf32>
    %287 = vector.multi_reduction <add>, %286, %cst_170 [0] : vector<3x8xf32> to vector<8xf32>
    %288 = vector.shape_cast %287 : vector<8xf32> to vector<1x8xf32>
    %289 = vector.broadcast %288 : vector<1x8xf32> to vector<3x8xf32>
    %290 = arith.divf %286, %289 : vector<3x8xf32>
    %c0_171 = arith.constant 0 : index
    %c0_172 = arith.constant 0 : index
    %291 = vector.load %arg4[%c0_171, %c0_172] : memref<16x8xf32, #tpu.memory_space<vmem>>, vector<16x8xf32>
    tpu.vector_store %arg4[%c0_171, %c0_172], %245 {strides = array<i32>} : memref<16x8xf32, #tpu.memory_space<vmem>>, vector<16x8xf32>,
    %c0_173 = arith.constant 0 : index
    %c0_174 = arith.constant 0 : index
    %292 = vector.load %arg5[%c0_173, %c0_174] : memref<3x8xf32, #tpu.memory_space<vmem>>, vector<3x8xf32>
    tpu.vector_store %arg5[%c0_173, %c0_174], %290 {strides = array<i32>} : memref<3x8xf32, #tpu.memory_space<vmem>>, vector<3x8xf32>,
    return
  }
}

</mosaic_0001>

<llo_original>
// kernel: pretrain_model_forward.1
$region0: #{pretrain_model_forward.1}
  #allocation0 [shape = 'u32[]', space=smem, size = 0x4, offset = 0x4, fixed_abs, tag = 'smem constant byte address 0x4 - core index']
  #allocation1 [shape = 'u32[144,128]{1,0:T(1,128)}', space=vmem, size = 0x12000, scoped, tag = 'internal scratch']
  #allocation2 [shape = 'f32[48,128]{1,0:T(8,128)}', space=vmem, size = 0x6000, scoped, tag = 'scratch operand']
  %s0 = inlined_call_operand.vmem [shape: f32[12,128], index: 0, kind: input, shape index: {}]
  %s1 = inlined_call_operand.hbm [shape: f32[312,128], index: 1, kind: input, shape index: {}]
  %s2 = inlined_call_operand.vmem [shape: f32[1,128], index: 2, kind: input, shape index: {}]
  %s3 = inlined_call_operand.vmem [shape: f32[128,8], index: 3, kind: input, shape index: {}]
  %s4 = inlined_call_operand.vmem [shape: f32[16,8], index: 4, kind: output, shape index: {0}]
  %s5 = inlined_call_operand.vmem [shape: f32[3,8], index: 5, kind: output, shape index: {1}]
  %6 = xla_tuple %s4, %s5
  %s7 = sld [smem:[#allocation0]]
  $region38: #{pretrain_model_forward.1} parent=0
    _
  %s9 = ssub.s32 1, %s7
  %s10 = scalar_select 0, %s9, %s7
  $region1: #{pretrain_model_forward.1} parent=0
    #allocation3 [shape = 'u8[159744]{0}', space=vmem, size = 0x27000, scoped, tag = 'input window, operand 1, single buffered']
    #allocation4 [shape = 's32[1]{0}', space=sflag, size = 0x4, scoped, tag = 'scoped memory for pretrain_model_forward.1']
    %11 = vsyncpa [#allocation4], 0
    // Predicated region
    $region2: #{pretrain_model_forward.1} parent=1 // pred_check
      _
    $region3: #{pretrain_model_forward.1} parent=1 // pred_check_branch
      %13 = sbr.rel (0) target = $region5
    $region4: #{pretrain_model_forward.1} parent=1 // pred_region
      _
    $region5: #{pretrain_model_forward.1} parent=1 // pred_fallthru
      _
    // Predicated region
    $region6: #{pretrain_model_forward.1} parent=1 // pred_check
      _
    $region7: #{pretrain_model_forward.1} parent=1 // pred_check_branch
      %15 = sbr.rel (0) target = $region9
    $region8: #{pretrain_model_forward.1} parent=1 // pred_region
      %s17 = ssub.s32 4992, 4992
      %18 = vsyncadd [#allocation4], %s17
      %s19 = sshll.u32 [#allocation3], 4
      %s20 = int_to_ptr.vmem [resolvable:$true] %s19
      %25 = dma.hbm_to_vmem [thread:$0]  %s1, 4992, %s20, [#allocation4], 128, 128, 8
    $region9: #{pretrain_model_forward.1} parent=1 // pred_fallthru
      _
    // Predicated region
    $region10: #{pretrain_model_forward.1} parent=1 // pred_check
      _
    $region11: #{pretrain_model_forward.1} parent=1 // pred_check_branch
      %27 = sbr.rel (0) target = $region13
    $region12: #{pretrain_model_forward.1} parent=1 // pred_region
      _
    $region13: #{pretrain_model_forward.1} parent=1 // pred_fallthru
      _
    // Predicated region
    $region14: #{pretrain_model_forward.1} parent=1 // pred_check
      _
    $region15: #{pretrain_model_forward.1} parent=1 // pred_check_branch
      %29 = sbr.rel (0) target = $region17
    $region16: #{pretrain_model_forward.1} parent=1 // pred_region
      _
    $region17: #{pretrain_model_forward.1} parent=1 // pred_fallthru
      _
    // Predicated region
    $region18: #{pretrain_model_forward.1} parent=1 // pred_check
      _
    $region19: #{pretrain_model_forward.1} parent=1 // pred_check_branch
      %31 = sbr.rel (0) target = $region21
    $region20: #{pretrain_model_forward.1} parent=1 // pred_region
      %32 = dma.done [#allocation4], 4992
    $region21: #{pretrain_model_forward.1} parent=1 // pred_fallthru
      _
    %33 = vst [vmem:[#allocation2] sm:$0xff] 0.0
    %34 = vst [vmem:[#allocation2 + $0x8] sm:$0xff] 0.0
    %35 = vst [vmem:[#allocation2 + $0x10] sm:$0xff] 0.0
    %36 = vst [vmem:[#allocation2 + $0x18] sm:$0xff] 0.0
    %37 = vst [vmem:[#allocation2 + $0x20] sm:$0xff] 0.0
    %38 = vst [vmem:[#allocation2 + $0x28] sm:$0xff] 0.0
    %v39 = vld [vmem:[%s2] sm:$0x1]
    %v40 = vlaneseq
    %v41 = vand.u32 %v40, 127
    %vm42 = vcmp.lt.s32.totalorder %v41, 2
    %v43 = vsel %vm42, 1, 0
    %v44 = vcvt.s32.f32 %v43
    %v45 = vld [vmem:[#allocation3] sm:$0x1]
    %vm46 = vcmask 16384
    %v47 = vsel %vm46, %v45, -inf
    %48 = vmax.xlane.f32.xlu0 %v47
    %v49 = vpop.xlane.xlu0 %48
    %v50 = vsub.f32 %v45, %v49
    %v51 = vmul.f32 %v50, 1.442695
    %v52 = vpow.pop %v51
    %v53 = vsel %vm46, %v52, 0.0
    %54 = vadd.xlane.f32.xlu0 %v53
    %v55 = vpop.xlane.xlu0 %54
    %v56 = vrcp.pop %v55
    %v57 = vmul.f32 %v52, %v56
    %v58 = vld [vmem:[%s0] sm:$0xff]
    %v59 = vld [vmem:[%s0 + $0x8] sm:$0xf]
    %s61 = vtos %v57
    %v62 = vstv %s61
    %v64 = vmul.f32 %v62, %v58
    %65 = vrot.lane.b32.xlu0 %v57, 127
    %v66 = vpop.permute.xlu0 %65
    %s67 = vtos %v66
    %v68 = vstv %s67
    %v70 = vmul.f32 %v68, %v58
    %v72 = vrot.slane %v70, 4
    %v74 = vadd.f32 %v64, %v72
    %75 = vrot.lane.b32.xlu0 %v57, 126
    %v76 = vpop.permute.xlu0 %75
    %s77 = vtos %v76
    %v78 = vstv %s77
    %v80 = vmul.f32 %v78, %v59
    %v81 = vadd.f32 %v74, %v80
    %v82 = vld [vmem:[#allocation3 + $0x8] sm:$0xff]
    %83 = vst [vmem:[#allocation2] sm:$0xf] %v81
    %84 = vst [vmem:[#allocation2 + $0x8] sm:$0xf] %v81
    %85 = vst [vmem:[#allocation2 + $0x10] sm:$0xf] %v81
    %v86 = vld [vmem:[#allocation2] sm:$0xff]
    %87 = vrot.lane.b32.xlu0 %v86, 2
    %v88 = vpop.permute.xlu0 %87
    %vm89 = vcmp.ge.f32.partialorder %v39, 2.0
    %v90 = vsel %vm89, 1, 0
    %v91 = vcvt.s32.f32 %v90
    %v93 = vlaneseq
    %v94 = vshrl.u32 %v93, 7
    %v95 = vsub.s32 0, %v94
    %v96 = vrot.slane %v91, %v95
    %v98 = vmul.f32 %v88, %v96
    %99 = vst [vmem:[#allocation2] sm:$0xff] %v98
    %v100 = vld [vmem:[#allocation2 + $0x8] sm:$0xff]
    %101 = vrot.lane.b32.xlu0 %v100, 1
    %v102 = vpop.permute.xlu0 %101
    %vm103 = vcmp.ge.f32.partialorder %v39, 1.0
    %v104 = vsel %vm103, 1, 0
    %v105 = vcvt.s32.f32 %v104
    %v107 = vlaneseq
    %v108 = vshrl.u32 %v107, 7
    %v109 = vsub.s32 0, %v108
    %v110 = vrot.slane %v105, %v109
    %v112 = vmul.f32 %v102, %v110
    %113 = vst [vmem:[#allocation2 + $0x8] sm:$0xff] %v112
    %v114 = vld [vmem:[#allocation2] sm:$0xff]
    %v115 = vld [vmem:[#allocation2 + $0x8] sm:$0xff]
    %v116 = vld [vmem:[#allocation2 + $0x10] sm:$0xff]
    %118 = vset.pattern.permute.xlu0 24
    %119 = vperm.xlu0 %118, %v82
    %v120 = vpop.permute.xlu0 %119
    %vm122 = vcmask 195584
    %v123 = vsel %vm122, %v82, 0
    %125 = vmatprep.subr.mxu0 0.0
    %126 = vmatpush1.msra.mxu0 %v114
    %127 = vmatprep.subr.mxu0 0.0
    %128 = vmatpush1.msra.mxu0 %v115
    %129 = vmatprep.subr.mxu0 0.0
    %130 = vmatpush1.msra.mxu0 %v116
    %131 = vmatprep.subr.mxu0 0.0
    %132 = vmatpush1.msra.mxu0 0.0
    %133 = vmatprep.subr.mxu0 0.0
    %134 = vmatpush1.msra.mxu0 0.0
    %135 = vmatprep.subr.mxu0 0.0
    %136 = vmatpush1.msra.mxu0 0.0
    %137 = vmatprep.subr.mxu0 0.0
    %138 = vmatpush1.msra.mxu0 0.0
    %139 = vmatprep.subr.mxu0 0.0
    %140 = vmatpush1.msra.mxu0 0.0
    %141 = vmatprep.subr.mxu0 0.0
    %142 = vmatpush1.msra.mxu0 0.0
    %143 = vmatprep.subr.mxu0 0.0
    %144 = vmatpush1.msra.mxu0 0.0
    %145 = vmatprep.subr.mxu0 0.0
    %146 = vmatpush1.msra.mxu0 0.0
    %147 = vmatprep.subr.mxu0 0.0
    %148 = vmatpush1.msra.mxu0 0.0
    %149 = vmatprep.subr.mxu0 0.0
    %150 = vmatpush1.msra.mxu0 0.0
    %151 = vmatprep.subr.mxu0 0.0
    %152 = vmatpush1.msra.mxu0 0.0
    %153 = vmatprep.subr.mxu0 0.0
    %154 = vmatpush1.msra.mxu0 0.0
    %155 = vmatprep.subr.mxu0 0.0
    %156 = vmatpush1.msra.mxu0 0.0
    %157 = vmatprep.subr.mxu0 0.0
    %158 = vmatpush1.msra.mxu0 0.0
    %159 = vmatprep.subr.mxu0 0.0
    %160 = vmatpush1.msra.mxu0 0.0
    %161 = vmatprep.subr.mxu0 0.0
    %162 = vmatpush1.msra.mxu0 0.0
    %163 = vmatprep.subr.mxu0 0.0
    %164 = vmatpush1.msra.mxu0 0.0
    %165 = vmatprep.subr.mxu0 0.0
    %166 = vmatpush1.msra.mxu0 0.0
    %167 = vmatprep.subr.mxu0 0.0
    %168 = vmatpush1.msra.mxu0 0.0
    %169 = vmatprep.subr.mxu0 0.0
    %170 = vmatpush1.msra.mxu0 0.0
    %171 = vmatprep.subr.mxu0 0.0
    %172 = vmatpush1.msra.mxu0 0.0
    %173 = vmatprep.subr.mxu0 0.0
    %174 = vmatpush1.msra.mxu0 0.0
    %175 = vmatprep.subr.mxu0 0.0
    %176 = vmatpush1.msra.mxu0 0.0
    %177 = vmatprep.subr.mxu0 0.0
    %178 = vmatpush1.msra.mxu0 0.0
    %179 = vmatprep.subr.mxu0 0.0
    %180 = vmatpush1.msra.mxu0 0.0
    %181 = vmatprep.subr.mxu0 0.0
    %182 = vmatpush1.msra.mxu0 0.0
    %183 = vmatprep.subr.mxu0 0.0
    %184 = vmatpush1.msra.mxu0 0.0
    %185 = vmatprep.subr.mxu0 0.0
    %186 = vmatpush1.msra.mxu0 0.0
    %187 = vmatprep.subr.mxu0 0.0
    %188 = vmatpush1.msra.mxu0 0.0
    %189 = vmatprep.mubr.f32.mxu0 0.0
    %190 = vmatmul.mubr.f32.gmra.mrb[0].mxu0 %v123
    %v191 = vpop.f32.mrb[0].mxu0
    %v192 = vadd.f32 %v120, %v191
    %v193 = vpop.f32.mrb[0].mxu0
    %194 = vdwg.mxu0
    %v195 = vmax.f32 %v192, 0.0
    %v196 = vld [vmem:[#allocation3 + $0x10] sm:$0xff]
    %197 = vst [vmem:[#allocation2] sm:$0xff] %v195
    %198 = vst [vmem:[#allocation2 + $0x8] sm:$0xff] %v195
    %199 = vst [vmem:[#allocation2 + $0x10] sm:$0xff] %v195
    %v200 = vld [vmem:[#allocation2] sm:$0xff]
    %201 = vrot.lane.b32.xlu0 %v200, 2
    %v202 = vpop.permute.xlu0 %201
    %v203 = vmul.f32 %v202, %v96
    %204 = vst [vmem:[#allocation2] sm:$0xff] %v203
    %v205 = vld [vmem:[#allocation2 + $0x8] sm:$0xff]
    %206 = vrot.lane.b32.xlu0 %v205, 1
    %v207 = vpop.permute.xlu0 %206
    %v208 = vmul.f32 %v207, %v110
    %209 = vst [vmem:[#allocation2 + $0x8] sm:$0xff] %v208
    %v210 = vld [vmem:[#allocation2] sm:$0xff]
    %v211 = vld [vmem:[#allocation2 + $0x8] sm:$0xff]
    %v212 = vld [vmem:[#allocation2 + $0x10] sm:$0xff]
    %214 = vset.pattern.permute.xlu0 24
    %215 = vperm.xlu0 %214, %v196
    %v216 = vpop.permute.xlu0 %215
    %v218 = vsel %vm122, %v196, 0
    %220 = vmatprep.subr.mxu0 0.0
    %221 = vmatpush1.msra.mxu0 %v210
    %222 = vmatprep.subr.mxu0 0.0
    %223 = vmatpush1.msra.mxu0 %v211
    %224 = vmatprep.subr.mxu0 0.0
    %225 = vmatpush1.msra.mxu0 %v212
    %226 = vmatprep.subr.mxu0 0.0
    %227 = vmatpush1.msra.mxu0 0.0
    %228 = vmatprep.subr.mxu0 0.0
    %229 = vmatpush1.msra.mxu0 0.0
    %230 = vmatprep.subr.mxu0 0.0
    %231 = vmatpush1.msra.mxu0 0.0
    %232 = vmatprep.subr.mxu0 0.0
    %233 = vmatpush1.msra.mxu0 0.0
    %234 = vmatprep.subr.mxu0 0.0
    %235 = vmatpush1.msra.mxu0 0.0
    %236 = vmatprep.subr.mxu0 0.0
    %237 = vmatpush1.msra.mxu0 0.0
    %238 = vmatprep.subr.mxu0 0.0
    %239 = vmatpush1.msra.mxu0 0.0
    %240 = vmatprep.subr.mxu0 0.0
    %241 = vmatpush1.msra.mxu0 0.0
    %242 = vmatprep.subr.mxu0 0.0
    %243 = vmatpush1.msra.mxu0 0.0
    %244 = vmatprep.subr.mxu0 0.0
    %245 = vmatpush1.msra.mxu0 0.0
    %246 = vmatprep.subr.mxu0 0.0
    %247 = vmatpush1.msra.mxu0 0.0
    %248 = vmatprep.subr.mxu0 0.0
    %249 = vmatpush1.msra.mxu0 0.0
    %250 = vmatprep.subr.mxu0 0.0
    %251 = vmatpush1.msra.mxu0 0.0
    %252 = vmatprep.subr.mxu0 0.0
    %253 = vmatpush1.msra.mxu0 0.0
    %254 = vmatprep.subr.mxu0 0.0
    %255 = vmatpush1.msra.mxu0 0.0
    %256 = vmatprep.subr.mxu0 0.0
    %257 = vmatpush1.msra.mxu0 0.0
    %258 = vmatprep.subr.mxu0 0.0
    %259 = vmatpush1.msra.mxu0 0.0
    %260 = vmatprep.subr.mxu0 0.0
    %261 = vmatpush1.msra.mxu0 0.0
    %262 = vmatprep.subr.mxu0 0.0
    %263 = vmatpush1.msra.mxu0 0.0
    %264 = vmatprep.subr.mxu0 0.0
    %265 = vmatpush1.msra.mxu0 0.0
    %266 = vmatprep.subr.mxu0 0.0
    %267 = vmatpush1.msra.mxu0 0.0
    %268 = vmatprep.subr.mxu0 0.0
    %269 = vmatpush1.msra.mxu0 0.0
    %270 = vmatprep.subr.mxu0 0.0
    %271 = vmatpush1.msra.mxu0 0.0
    %272 = vmatprep.subr.mxu0 0.0
    %273 = vmatpush1.msra.mxu0 0.0
    %274 = vmatprep.subr.mxu0 0.0
    %275 = vmatpush1.msra.mxu0 0.0
    %276 = vmatprep.subr.mxu0 0.0
    %277 = vmatpush1.msra.mxu0 0.0
    %278 = vmatprep.subr.mxu0 0.0
    %279 = vmatpush1.msra.mxu0 0.0
    %280 = vmatprep.subr.mxu0 0.0
    %281 = vmatpush1.msra.mxu0 0.0
    %282 = vmatprep.subr.mxu0 0.0
    %283 = vmatpush1.msra.mxu0 0.0
    %284 = vmatprep.mubr.f32.mxu0 0.0
    %285 = vmatmul.mubr.f32.gmra.mrb[0].mxu0 %v218
    %v286 = vpop.f32.mrb[0].mxu0
    %v287 = vadd.f32 %v216, %v286
    %v288 = vpop.f32.mrb[0].mxu0
    %289 = vdwg.mxu0
    %v290 = vmax.f32 %v287, 0.0
    %v291 = vld [vmem:[#allocation3 + $0x18] sm:$0xff]
    %293 = vset.pattern.permute.xlu0 4
    %294 = vperm.xlu0 %293, %v291
    %v295 = vpop.permute.xlu0 %294
    %vm297 = vcmask 31744
    %v298 = vsel %vm297, %v291, 0
    %vm300 = vcmask 1043456
    %v302 = vsel %vm300, %v81, 0
    %304 = vmatprep.subr.mxu0 0.0
    %305 = vmatpush1.msra.mxu0 %v302
    %306 = vmatprep.subr.mxu0 0.0
    %307 = vmatpush1.msra.mxu0 0.0
    %308 = vmatprep.subr.mxu0 0.0
    %309 = vmatpush1.msra.mxu0 0.0
    %310 = vmatprep.subr.mxu0 0.0
    %311 = vmatpush1.msra.mxu0 0.0
    %312 = vmatprep.subr.mxu0 0.0
    %313 = vmatpush1.msra.mxu0 0.0
    %314 = vmatprep.subr.mxu0 0.0
    %315 = vmatpush1.msra.mxu0 0.0
    %316 = vmatprep.subr.mxu0 0.0
    %317 = vmatpush1.msra.mxu0 0.0
    %318 = vmatprep.subr.mxu0 0.0
    %319 = vmatpush1.msra.mxu0 0.0
    %320 = vmatprep.subr.mxu0 0.0
    %321 = vmatpush1.msra.mxu0 0.0
    %322 = vmatprep.subr.mxu0 0.0
    %323 = vmatpush1.msra.mxu0 0.0
    %324 = vmatprep.subr.mxu0 0.0
    %325 = vmatpush1.msra.mxu0 0.0
    %326 = vmatprep.subr.mxu0 0.0
    %327 = vmatpush1.msra.mxu0 0.0
    %328 = vmatprep.subr.mxu0 0.0
    %329 = vmatpush1.msra.mxu0 0.0
    %330 = vmatprep.subr.mxu0 0.0
    %331 = vmatpush1.msra.mxu0 0.0
    %332 = vmatprep.subr.mxu0 0.0
    %333 = vmatpush1.msra.mxu0 0.0
    %334 = vmatprep.subr.mxu0 0.0
    %335 = vmatpush1.msra.mxu0 0.0
    %336 = vmatprep.subr.mxu0 0.0
    %337 = vmatpush1.msra.mxu0 0.0
    %338 = vmatprep.subr.mxu0 0.0
    %339 = vmatpush1.msra.mxu0 0.0
    %340 = vmatprep.subr.mxu0 0.0
    %341 = vmatpush1.msra.mxu0 0.0
    %342 = vmatprep.subr.mxu0 0.0
    %343 = vmatpush1.msra.mxu0 0.0
    %344 = vmatprep.subr.mxu0 0.0
    %345 = vmatpush1.msra.mxu0 0.0
    %346 = vmatprep.subr.mxu0 0.0
    %347 = vmatpush1.msra.mxu0 0.0
    %348 = vmatprep.subr.mxu0 0.0
    %349 = vmatpush1.msra.mxu0 0.0
    %350 = vmatprep.subr.mxu0 0.0
    %351 = vmatpush1.msra.mxu0 0.0
    %352 = vmatprep.subr.mxu0 0.0
    %353 = vmatpush1.msra.mxu0 0.0
    %354 = vmatprep.subr.mxu0 0.0
    %355 = vmatpush1.msra.mxu0 0.0
    %356 = vmatprep.subr.mxu0 0.0
    %357 = vmatpush1.msra.mxu0 0.0
    %358 = vmatprep.subr.mxu0 0.0
    %359 = vmatpush1.msra.mxu0 0.0
    %360 = vmatprep.subr.mxu0 0.0
    %361 = vmatpush1.msra.mxu0 0.0
    %362 = vmatprep.subr.mxu0 0.0
    %363 = vmatpush1.msra.mxu0 0.0
    %364 = vmatprep.subr.mxu0 0.0
    %365 = vmatpush1.msra.mxu0 0.0
    %366 = vmatprep.subr.mxu0 0.0
    %367 = vmatpush1.msra.mxu0 0.0
    %368 = vmatprep.mubr.f32.mxu0 0.0
    %369 = vmatmul.mubr.f32.gmra.mrb[0].mxu0 %v298
    %v370 = vpop.f32.mrb[0].mxu0
    %v371 = vadd.f32 %v295, %v370
    %v372 = vpop.f32.mrb[0].mxu0
    %373 = vdwg.mxu0
    %v374 = vadd.f32 %v290, %v371
    %v375 = vmax.f32 %v374, 0.0
    %v376 = vld [vmem:[#allocation3 + $0x20] sm:$0xff]
    %v377 = vld [vmem:[#allocation3 + $0x28] sm:$0xff]
    %378 = vst [vmem:[#allocation2] sm:$0xff] %v375
    %379 = vst [vmem:[#allocation2 + $0x8] sm:$0xff] %v375
    %380 = vst [vmem:[#allocation2 + $0x10] sm:$0xff] %v375
    %v381 = vld [vmem:[#allocation2] sm:$0xff]
    %382 = vrot.lane.b32.xlu0 %v381, 4
    %v383 = vpop.permute.xlu0 %382
    %vm384 = vcmp.ge.f32.partialorder %v39, 4.0
    %v385 = vsel %vm384, 1, 0
    %v386 = vcvt.s32.f32 %v385
    %v388 = vlaneseq
    %v389 = vshrl.u32 %v388, 7
    %v390 = vsub.s32 0, %v389
    %v391 = vrot.slane %v386, %v390
    %v393 = vmul.f32 %v383, %v391
    %394 = vst [vmem:[#allocation2] sm:$0xff] %v393
    %v395 = vld [vmem:[#allocation2 + $0x8] sm:$0xff]
    %396 = vrot.lane.b32.xlu0 %v395, 2
    %v397 = vpop.permute.xlu0 %396
    %v398 = vmul.f32 %v397, %v96
    %399 = vst [vmem:[#allocation2 + $0x8] sm:$0xff] %v398
    %v400 = vld [vmem:[#allocation2] sm:$0xff]
    %v401 = vld [vmem:[#allocation2 + $0x8] sm:$0xff]
    %v402 = vld [vmem:[#allocation2 + $0x10] sm:$0xff]
    %404 = vset.pattern.permute.xlu0 24
    %405 = vperm.xlu0 %404, %v376
    %v406 = vpop.permute.xlu0 %405
    %409 = vset.pattern.permute.xlu0 24
    %410 = vperm.xlu0 %409, %v377
    %v411 = vpop.permute.xlu0 %410
    %v413 = vsel %vm122, %v376, 0
    %v415 = vsel %vm122, %v377, 0
    %417 = vmatprep.subr.mxu0 0.0
    %418 = vmatpush1.msra.mxu0 %v400
    %419 = vmatprep.subr.mxu0 0.0
    %420 = vmatpush1.msra.mxu0 %v401
    %421 = vmatprep.subr.mxu0 0.0
    %422 = vmatpush1.msra.mxu0 %v402
    %423 = vmatprep.subr.mxu0 0.0
    %424 = vmatpush1.msra.mxu0 0.0
    %425 = vmatprep.subr.mxu0 0.0
    %426 = vmatpush1.msra.mxu0 0.0
    %427 = vmatprep.subr.mxu0 0.0
    %428 = vmatpush1.msra.mxu0 0.0
    %429 = vmatprep.subr.mxu0 0.0
    %430 = vmatpush1.msra.mxu0 0.0
    %431 = vmatprep.subr.mxu0 0.0
    %432 = vmatpush1.msra.mxu0 0.0
    %433 = vmatprep.subr.mxu0 0.0
    %434 = vmatpush1.msra.mxu0 0.0
    %435 = vmatprep.subr.mxu0 0.0
    %436 = vmatpush1.msra.mxu0 0.0
    %437 = vmatprep.subr.mxu0 0.0
    %438 = vmatpush1.msra.mxu0 0.0
    %439 = vmatprep.subr.mxu0 0.0
    %440 = vmatpush1.msra.mxu0 0.0
    %441 = vmatprep.subr.mxu0 0.0
    %442 = vmatpush1.msra.mxu0 0.0
    %443 = vmatprep.subr.mxu0 0.0
    %444 = vmatpush1.msra.mxu0 0.0
    %445 = vmatprep.subr.mxu0 0.0
    %446 = vmatpush1.msra.mxu0 0.0
    %447 = vmatprep.subr.mxu0 0.0
    %448 = vmatpush1.msra.mxu0 0.0
    %449 = vmatprep.subr.mxu0 0.0
    %450 = vmatpush1.msra.mxu0 0.0
    %451 = vmatprep.subr.mxu0 0.0
    %452 = vmatpush1.msra.mxu0 0.0
    %453 = vmatprep.subr.mxu0 0.0
    %454 = vmatpush1.msra.mxu0 0.0
    %455 = vmatprep.subr.mxu0 0.0
    %456 = vmatpush1.msra.mxu0 0.0
    %457 = vmatprep.subr.mxu0 0.0
    %458 = vmatpush1.msra.mxu0 0.0
    %459 = vmatprep.subr.mxu0 0.0
    %460 = vmatpush1.msra.mxu0 0.0
    %461 = vmatprep.subr.mxu0 0.0
    %462 = vmatpush1.msra.mxu0 0.0
    %463 = vmatprep.subr.mxu0 0.0
    %464 = vmatpush1.msra.mxu0 0.0
    %465 = vmatprep.subr.mxu0 0.0
    %466 = vmatpush1.msra.mxu0 0.0
    %467 = vmatprep.subr.mxu0 0.0
    %468 = vmatpush1.msra.mxu0 0.0
    %469 = vmatprep.subr.mxu0 0.0
    %470 = vmatpush1.msra.mxu0 0.0
    %471 = vmatprep.subr.mxu0 0.0
    %472 = vmatpush1.msra.mxu0 0.0
    %473 = vmatprep.subr.mxu0 0.0
    %474 = vmatpush1.msra.mxu0 0.0
    %475 = vmatprep.subr.mxu0 0.0
    %476 = vmatpush1.msra.mxu0 0.0
    %477 = vmatprep.subr.mxu0 0.0
    %478 = vmatpush1.msra.mxu0 0.0
    %479 = vmatprep.subr.mxu0 0.0
    %480 = vmatpush1.msra.mxu0 0.0
    %481 = vmatprep.mubr.f32.mxu0 0.0
    %482 = vmatmul.mubr.f32.gmra.mrb[0].mxu0 %v413
    %v483 = vpop.f32.mrb[0].mxu0
    %v484 = vadd.f32 %v406, %v483
    %v485 = vpop.f32.mrb[0].mxu0
    %486 = vmatprep.mubr.f32.mxu0 0.0
    %487 = vmatmul.mubr.f32.gmra.mrb[0].mxu0 %v415
    %v488 = vpop.f32.mrb[0].mxu0
    %v489 = vadd.f32 %v411, %v488
    %v490 = vpop.f32.mrb[0].mxu0
    %491 = vdwg.mxu0
    %v492 = vmax.f32 %v484, 0.0
    %v493 = vmax.f32 %v489, 0.0
    %v494 = vld [vmem:[#allocation3 + $0x30] sm:$0xff]
    %v495 = vld [vmem:[#allocation3 + $0x38] sm:$0xff]
    %496 = vst [vmem:[#allocation2] sm:$0xff] %v492
    %497 = vst [vmem:[#allocation2 + $0x8] sm:$0xff] %v493
    %498 = vst [vmem:[#allocation2 + $0x10] sm:$0xff] %v492
    %499 = vst [vmem:[#allocation2 + $0x18] sm:$0xff] %v493
    %500 = vst [vmem:[#allocation2 + $0x20] sm:$0xff] %v492
    %501 = vst [vmem:[#allocation2 + $0x28] sm:$0xff] %v493
    %v502 = vld [vmem:[#allocation2] sm:$0xff]
    %v503 = vld [vmem:[#allocation2 + $0x8] sm:$0xff]
    %504 = vrot.lane.b32.xlu0 %v502, 4
    %v505 = vpop.permute.xlu0 %504
    %506 = vrot.lane.b32.xlu0 %v503, 4
    %v507 = vpop.permute.xlu0 %506
    %v508 = vmul.f32 %v505, %v391
    %v509 = vmul.f32 %v507, %v391
    %510 = vst [vmem:[#allocation2] sm:$0xff] %v508
    %511 = vst [vmem:[#allocation2 + $0x8] sm:$0xff] %v509
    %v512 = vld [vmem:[#allocation2 + $0x10] sm:$0xff]
    %v513 = vld [vmem:[#allocation2 + $0x18] sm:$0xff]
    %514 = vrot.lane.b32.xlu0 %v512, 2
    %v515 = vpop.permute.xlu0 %514
    %516 = vrot.lane.b32.xlu0 %v513, 2
    %v517 = vpop.permute.xlu0 %516
    %v518 = vmul.f32 %v515, %v96
    %v519 = vmul.f32 %v517, %v96
    %520 = vst [vmem:[#allocation2 + $0x10] sm:$0xff] %v518
    %521 = vst [vmem:[#allocation2 + $0x18] sm:$0xff] %v519
    %v522 = vld [vmem:[#allocation2] sm:$0xff]
    %v523 = vld [vmem:[#allocation2 + $0x8] sm:$0xff]
    %v524 = vld [vmem:[#allocation2 + $0x10] sm:$0xff]
    %v525 = vld [vmem:[#allocation2 + $0x18] sm:$0xff]
    %v526 = vld [vmem:[#allocation2 + $0x20] sm:$0xff]
    %v527 = vld [vmem:[#allocation2 + $0x28] sm:$0xff]
    %529 = vset.pattern.permute.xlu0 48
    %530 = vperm.xlu0 %529, %v494
    %v531 = vpop.permute.xlu0 %530
    %534 = vset.pattern.permute.xlu0 48
    %535 = vperm.xlu0 %534, %v495
    %v536 = vpop.permute.xlu0 %535
    %vm538 = vcmask 392192
    %v539 = vsel %vm538, %v494, 0
    %v541 = vsel %vm538, %v495, 0
    %543 = vmatprep.subr.mxu0 0.0
    %544 = vmatpush1.msra.mxu0 %v522
    %545 = vmatprep.subr.mxu0 0.0
    %546 = vmatpush1.msra.mxu0 %v523
    %547 = vmatprep.subr.mxu0 0.0
    %548 = vmatpush1.msra.mxu0 %v524
    %549 = vmatprep.subr.mxu0 0.0
    %550 = vmatpush1.msra.mxu0 %v525
    %551 = vmatprep.subr.mxu0 0.0
    %552 = vmatpush1.msra.mxu0 %v526
    %553 = vmatprep.subr.mxu0 0.0
    %554 = vmatpush1.msra.mxu0 %v527
    %555 = vmatprep.subr.mxu0 0.0
    %556 = vmatpush1.msra.mxu0 0.0
    %557 = vmatprep.subr.mxu0 0.0
    %558 = vmatpush1.msra.mxu0 0.0
    %559 = vmatprep.subr.mxu0 0.0
    %560 = vmatpush1.msra.mxu0 0.0
    %561 = vmatprep.subr.mxu0 0.0
    %562 = vmatpush1.msra.mxu0 0.0
    %563 = vmatprep.subr.mxu0 0.0
    %564 = vmatpush1.msra.mxu0 0.0
    %565 = vmatprep.subr.mxu0 0.0
    %566 = vmatpush1.msra.mxu0 0.0
    %567 = vmatprep.subr.mxu0 0.0
    %568 = vmatpush1.msra.mxu0 0.0
    %569 = vmatprep.subr.mxu0 0.0
    %570 = vmatpush1.msra.mxu0 0.0
    %571 = vmatprep.subr.mxu0 0.0
    %572 = vmatpush1.msra.mxu0 0.0
    %573 = vmatprep.subr.mxu0 0.0
    %574 = vmatpush1.msra.mxu0 0.0
    %575 = vmatprep.subr.mxu0 0.0
    %576 = vmatpush1.msra.mxu0 0.0
    %577 = vmatprep.subr.mxu0 0.0
    %578 = vmatpush1.msra.mxu0 0.0
    %579 = vmatprep.subr.mxu0 0.0
    %580 = vmatpush1.msra.mxu0 0.0
    %581 = vmatprep.subr.mxu0 0.0
    %582 = vmatpush1.msra.mxu0 0.0
    %583 = vmatprep.subr.mxu0 0.0
    %584 = vmatpush1.msra.mxu0 0.0
    %585 = vmatprep.subr.mxu0 0.0
    %586 = vmatpush1.msra.mxu0 0.0
    %587 = vmatprep.subr.mxu0 0.0
    %588 = vmatpush1.msra.mxu0 0.0
    %589 = vmatprep.subr.mxu0 0.0
    %590 = vmatpush1.msra.mxu0 0.0
    %591 = vmatprep.subr.mxu0 0.0
    %592 = vmatpush1.msra.mxu0 0.0
    %593 = vmatprep.subr.mxu0 0.0
    %594 = vmatpush1.msra.mxu0 0.0
    %595 = vmatprep.subr.mxu0 0.0
    %596 = vmatpush1.msra.mxu0 0.0
    %597 = vmatprep.subr.mxu0 0.0
    %598 = vmatpush1.msra.mxu0 0.0
    %599 = vmatprep.subr.mxu0 0.0
    %600 = vmatpush1.msra.mxu0 0.0
    %601 = vmatprep.subr.mxu0 0.0
    %602 = vmatpush1.msra.mxu0 0.0
    %603 = vmatprep.subr.mxu0 0.0
    %604 = vmatpush1.msra.mxu0 0.0
    %605 = vmatprep.subr.mxu0 0.0
    %606 = vmatpush1.msra.mxu0 0.0
    %607 = vmatprep.mubr.f32.mxu0 0.0
    %608 = vmatmul.mubr.f32.gmra.mrb[0].mxu0 %v539
    %v609 = vpop.f32.mrb[0].mxu0
    %v610 = vadd.f32 %v531, %v609
    %v611 = vpop.f32.mrb[0].mxu0
    %612 = vmatprep.mubr.f32.mxu0 0.0
    %613 = vmatmul.mubr.f32.gmra.mrb[0].mxu0 %v541
    %v614 = vpop.f32.mrb[0].mxu0
    %v615 = vadd.f32 %v536, %v614
    %v616 = vpop.f32.mrb[0].mxu0
    %617 = vdwg.mxu0
    %v618 = vmax.f32 %v610, 0.0
    %v619 = vmax.f32 %v615, 0.0
    %v620 = vld [vmem:[#allocation3 + $0x40] sm:$0xff]
    %v621 = vld [vmem:[#allocation3 + $0x48] sm:$0xff]
    %623 = vset.pattern.permute.xlu0 8
    %624 = vperm.xlu0 %623, %v620
    %v625 = vpop.permute.xlu0 %624
    %628 = vset.pattern.permute.xlu0 8
    %629 = vperm.xlu0 %628, %v621
    %v630 = vpop.permute.xlu0 %629
    %vm632 = vcmask 64512
    %v633 = vsel %vm632, %v620, 0
    %v635 = vsel %vm632, %v621, 0
    %637 = vmatprep.subr.mxu0 0.0
    %638 = vmatpush1.msra.mxu0 %v375
    %639 = vmatprep.subr.mxu0 0.0
    %640 = vmatpush1.msra.mxu0 0.0
    %641 = vmatprep.subr.mxu0 0.0
    %642 = vmatpush1.msra.mxu0 0.0
    %643 = vmatprep.subr.mxu0 0.0
    %644 = vmatpush1.msra.mxu0 0.0
    %645 = vmatprep.subr.mxu0 0.0
    %646 = vmatpush1.msra.mxu0 0.0
    %647 = vmatprep.subr.mxu0 0.0
    %648 = vmatpush1.msra.mxu0 0.0
    %649 = vmatprep.subr.mxu0 0.0
    %650 = vmatpush1.msra.mxu0 0.0
    %651 = vmatprep.subr.mxu0 0.0
    %652 = vmatpush1.msra.mxu0 0.0
    %653 = vmatprep.subr.mxu0 0.0
    %654 = vmatpush1.msra.mxu0 0.0
    %655 = vmatprep.subr.mxu0 0.0
    %656 = vmatpush1.msra.mxu0 0.0
    %657 = vmatprep.subr.mxu0 0.0
    %658 = vmatpush1.msra.mxu0 0.0
    %659 = vmatprep.subr.mxu0 0.0
    %660 = vmatpush1.msra.mxu0 0.0
    %661 = vmatprep.subr.mxu0 0.0
    %662 = vmatpush1.msra.mxu0 0.0
    %663 = vmatprep.subr.mxu0 0.0
    %664 = vmatpush1.msra.mxu0 0.0
    %665 = vmatprep.subr.mxu0 0.0
    %666 = vmatpush1.msra.mxu0 0.0
    %667 = vmatprep.subr.mxu0 0.0
    %668 = vmatpush1.msra.mxu0 0.0
    %669 = vmatprep.subr.mxu0 0.0
    %670 = vmatpush1.msra.mxu0 0.0
    %671 = vmatprep.subr.mxu0 0.0
    %672 = vmatpush1.msra.mxu0 0.0
    %673 = vmatprep.subr.mxu0 0.0
    %674 = vmatpush1.msra.mxu0 0.0
    %675 = vmatprep.subr.mxu0 0.0
    %676 = vmatpush1.msra.mxu0 0.0
    %677 = vmatprep.subr.mxu0 0.0
    %678 = vmatpush1.msra.mxu0 0.0
    %679 = vmatprep.subr.mxu0 0.0
    %680 = vmatpush1.msra.mxu0 0.0
    %681 = vmatprep.subr.mxu0 0.0
    %682 = vmatpush1.msra.mxu0 0.0
    %683 = vmatprep.subr.mxu0 0.0
    %684 = vmatpush1.msra.mxu0 0.0
    %685 = vmatprep.subr.mxu0 0.0
    %686 = vmatpush1.msra.mxu0 0.0
    %687 = vmatprep.subr.mxu0 0.0
    %688 = vmatpush1.msra.mxu0 0.0
    %689 = vmatprep.subr.mxu0 0.0
    %690 = vmatpush1.msra.mxu0 0.0
    %691 = vmatprep.subr.mxu0 0.0
    %692 = vmatpush1.msra.mxu0 0.0
    %693 = vmatprep.subr.mxu0 0.0
    %694 = vmatpush1.msra.mxu0 0.0
    %695 = vmatprep.subr.mxu0 0.0
    %696 = vmatpush1.msra.mxu0 0.0
    %697 = vmatprep.subr.mxu0 0.0
    %698 = vmatpush1.msra.mxu0 0.0
    %699 = vmatprep.subr.mxu0 0.0
    %700 = vmatpush1.msra.mxu0 0.0
    %701 = vmatprep.mubr.f32.mxu0 0.0
    %702 = vmatmul.mubr.f32.gmra.mrb[0].mxu0 %v633
    %v703 = vpop.f32.mrb[0].mxu0
    %v704 = vadd.f32 %v625, %v703
    %v705 = vpop.f32.mrb[0].mxu0
    %706 = vmatprep.mubr.f32.mxu0 0.0
    %707 = vmatmul.mubr.f32.gmra.mrb[0].mxu0 %v635
    %v708 = vpop.f32.mrb[0].mxu0
    %v709 = vadd.f32 %v630, %v708
    %v710 = vpop.f32.mrb[0].mxu0
    %711 = vdwg.mxu0
    %v712 = vadd.f32 %v618, %v704
    %v713 = vadd.f32 %v619, %v709
    %v714 = vmax.f32 %v712, 0.0
    %v715 = vmax.f32 %v713, 0.0
    %v716 = vld [vmem:[%s3] sm:$0xff]
    %v717 = vld [vmem:[%s3 + $0x8] sm:$0xff]
    %v718 = vld [vmem:[%s3 + $0x10] sm:$0xff]
    %v719 = vld [vmem:[%s3 + $0x18] sm:$0xff]
    %v720 = vld [vmem:[%s3 + $0x20] sm:$0xff]
    %v721 = vld [vmem:[%s3 + $0x28] sm:$0xff]
    %v722 = vld [vmem:[%s3 + $0x30] sm:$0xff]
    %v723 = vld [vmem:[%s3 + $0x38] sm:$0xff]
    %v724 = vld [vmem:[%s3 + $0x40] sm:$0xff]
    %v725 = vld [vmem:[%s3 + $0x48] sm:$0xff]
    %v726 = vld [vmem:[%s3 + $0x50] sm:$0xff]
    %v727 = vld [vmem:[%s3 + $0x58] sm:$0xff]
    %v728 = vld [vmem:[%s3 + $0x60] sm:$0xff]
    %v729 = vld [vmem:[%s3 + $0x68] sm:$0xff]
    %v730 = vld [vmem:[%s3 + $0x70] sm:$0xff]
    %v731 = vld [vmem:[%s3 + $0x78] sm:$0xff]
    %732 = vmatprep.subr.mxu0 0.0
    %733 = vmatpush1.msra.mxu0 %v716
    %734 = vmatprep.subr.mxu0 0.0
    %735 = vmatpush1.msra.mxu0 %v717
    %736 = vmatprep.subr.mxu0 0.0
    %737 = vmatpush1.msra.mxu0 %v718
    %738 = vmatprep.subr.mxu0 0.0
    %739 = vmatpush1.msra.mxu0 %v719
    %740 = vmatprep.subr.mxu0 0.0
    %741 = vmatpush1.msra.mxu0 %v720
    %742 = vmatprep.subr.mxu0 0.0
    %743 = vmatpush1.msra.mxu0 %v721
    %744 = vmatprep.subr.mxu0 0.0
    %745 = vmatpush1.msra.mxu0 %v722
    %746 = vmatprep.subr.mxu0 0.0
    %747 = vmatpush1.msra.mxu0 %v723
    %748 = vmatprep.subr.mxu0 0.0
    %749 = vmatpush1.msra.mxu0 %v724
    %750 = vmatprep.subr.mxu0 0.0
    %751 = vmatpush1.msra.mxu0 %v725
    %752 = vmatprep.subr.mxu0 0.0
    %753 = vmatpush1.msra.mxu0 %v726
    %754 = vmatprep.subr.mxu0 0.0
    %755 = vmatpush1.msra.mxu0 %v727
    %756 = vmatprep.subr.mxu0 0.0
    %757 = vmatpush1.msra.mxu0 %v728
    %758 = vmatprep.subr.mxu0 0.0
    %759 = vmatpush1.msra.mxu0 %v729
    %760 = vmatprep.subr.mxu0 0.0
    %761 = vmatpush1.msra.mxu0 %v730
    %762 = vmatprep.subr.mxu0 0.0
    %763 = vmatpush1.msra.mxu0 %v731
    %764 = vmatprep.subr.mxu0 0.0
    %765 = vmatpush1.msra.mxu0 0.0
    %766 = vmatprep.subr.mxu0 0.0
    %767 = vmatpush1.msra.mxu0 0.0
    %768 = vmatprep.subr.mxu0 0.0
    %769 = vmatpush1.msra.mxu0 0.0
    %770 = vmatprep.subr.mxu0 0.0
    %771 = vmatpush1.msra.mxu0 0.0
    %772 = vmatprep.subr.mxu0 0.0
    %773 = vmatpush1.msra.mxu0 0.0
    %774 = vmatprep.subr.mxu0 0.0
    %775 = vmatpush1.msra.mxu0 0.0
    %776 = vmatprep.subr.mxu0 0.0
    %777 = vmatpush1.msra.mxu0 0.0
    %778 = vmatprep.subr.mxu0 0.0
    %779 = vmatpush1.msra.mxu0 0.0
    %780 = vmatprep.subr.mxu0 0.0
    %781 = vmatpush1.msra.mxu0 0.0
    %782 = vmatprep.subr.mxu0 0.0
    %783 = vmatpush1.msra.mxu0 0.0
    %784 = vmatprep.subr.mxu0 0.0
    %785 = vmatpush1.msra.mxu0 0.0
    %786 = vmatprep.subr.mxu0 0.0
    %787 = vmatpush1.msra.mxu0 0.0
    %788 = vmatprep.subr.mxu0 0.0
    %789 = vmatpush1.msra.mxu0 0.0
    %790 = vmatprep.subr.mxu0 0.0
    %791 = vmatpush1.msra.mxu0 0.0
    %792 = vmatprep.subr.mxu0 0.0
    %793 = vmatpush1.msra.mxu0 0.0
    %794 = vmatprep.subr.mxu0 0.0
    %795 = vmatpush1.msra.mxu0 0.0
    %796 = vmatprep.mubr.f32.mxu0 0.0
    %797 = vmatmul.mubr.f32.gmra.mrb[0].mxu0 %v714
    %v798 = vpop.f32.mrb[0].mxu0
    %v799 = vadd.f32 0.0, %v798
    %v800 = vpop.f32.mrb[0].mxu0
    %801 = vmatprep.mubr.f32.mxu0 0.0
    %802 = vmatmul.mubr.f32.gmra.mrb[0].mxu0 %v715
    %v803 = vpop.f32.mrb[0].mxu0
    %v804 = vadd.f32 0.0, %v803
    %v805 = vpop.f32.mrb[0].mxu0
    %806 = vdwg.mxu0
    %v807 = vld [vmem:[#allocation3 + $0x50] sm:$0xff]
    %v808 = vld [vmem:[#allocation3 + $0x58] sm:$0xff]
    %v809 = vld [vmem:[#allocation3 + $0x60] sm:$0xff]
    %v810 = vld [vmem:[#allocation3 + $0x68] sm:$0xff]
    %812 = vset.pattern.permute.xlu0 16
    %813 = vperm.xlu0 %812, %v807
    %v814 = vpop.permute.xlu0 %813
    %817 = vset.pattern.permute.xlu0 16
    %818 = vperm.xlu0 %817, %v808
    %v819 = vpop.permute.xlu0 %818
    %822 = vset.pattern.permute.xlu0 16
    %823 = vperm.xlu0 %822, %v809
    %v824 = vpop.permute.xlu0 %823
    %827 = vset.pattern.permute.xlu0 16
    %828 = vperm.xlu0 %827, %v810
    %v829 = vpop.permute.xlu0 %828
    %vm831 = vcmask 130048
    %v832 = vsel %vm831, %v807, 0
    %v834 = vsel %vm831, %v808, 0
    %v836 = vsel %vm831, %v809, 0
    %v838 = vsel %vm831, %v810, 0
    %840 = vmatprep.subr.mxu0 0.0
    %841 = vmatpush1.msra.mxu0 %v799
    %842 = vmatprep.subr.mxu0 0.0
    %843 = vmatpush1.msra.mxu0 %v804
    %844 = vmatprep.subr.mxu0 0.0
    %845 = vmatpush1.msra.mxu0 0.0
    %846 = vmatprep.subr.mxu0 0.0
    %847 = vmatpush1.msra.mxu0 0.0
    %848 = vmatprep.subr.mxu0 0.0
    %849 = vmatpush1.msra.mxu0 0.0
    %850 = vmatprep.subr.mxu0 0.0
    %851 = vmatpush1.msra.mxu0 0.0
    %852 = vmatprep.subr.mxu0 0.0
    %853 = vmatpush1.msra.mxu0 0.0
    %854 = vmatprep.subr.mxu0 0.0
    %855 = vmatpush1.msra.mxu0 0.0
    %856 = vmatprep.subr.mxu0 0.0
    %857 = vmatpush1.msra.mxu0 0.0
    %858 = vmatprep.subr.mxu0 0.0
    %859 = vmatpush1.msra.mxu0 0.0
    %860 = vmatprep.subr.mxu0 0.0
    %861 = vmatpush1.msra.mxu0 0.0
    %862 = vmatprep.subr.mxu0 0.0
    %863 = vmatpush1.msra.mxu0 0.0
    %864 = vmatprep.subr.mxu0 0.0
    %865 = vmatpush1.msra.mxu0 0.0
    %866 = vmatprep.subr.mxu0 0.0
    %867 = vmatpush1.msra.mxu0 0.0
    %868 = vmatprep.subr.mxu0 0.0
    %869 = vmatpush1.msra.mxu0 0.0
    %870 = vmatprep.subr.mxu0 0.0
    %871 = vmatpush1.msra.mxu0 0.0
    %872 = vmatprep.subr.mxu0 0.0
    %873 = vmatpush1.msra.mxu0 0.0
    %874 = vmatprep.subr.mxu0 0.0
    %875 = vmatpush1.msra.mxu0 0.0
    %876 = vmatprep.subr.mxu0 0.0
    %877 = vmatpush1.msra.mxu0 0.0
    %878 = vmatprep.subr.mxu0 0.0
    %879 = vmatpush1.msra.mxu0 0.0
    %880 = vmatprep.subr.mxu0 0.0
    %881 = vmatpush1.msra.mxu0 0.0
    %882 = vmatprep.subr.mxu0 0.0
    %883 = vmatpush1.msra.mxu0 0.0
    %884 = vmatprep.subr.mxu0 0.0
    %885 = vmatpush1.msra.mxu0 0.0
    %886 = vmatprep.subr.mxu0 0.0
    %887 = vmatpush1.msra.mxu0 0.0
    %888 = vmatprep.subr.mxu0 0.0
    %889 = vmatpush1.msra.mxu0 0.0
    %890 = vmatprep.subr.mxu0 0.0
    %891 = vmatpush1.msra.mxu0 0.0
    %892 = vmatprep.subr.mxu0 0.0
    %893 = vmatpush1.msra.mxu0 0.0
    %894 = vmatprep.subr.mxu0 0.0
    %895 = vmatpush1.msra.mxu0 0.0
    %896 = vmatprep.subr.mxu0 0.0
    %897 = vmatpush1.msra.mxu0 0.0
    %898 = vmatprep.subr.mxu0 0.0
    %899 = vmatpush1.msra.mxu0 0.0
    %900 = vmatprep.subr.mxu0 0.0
    %901 = vmatpush1.msra.mxu0 0.0
    %902 = vmatprep.subr.mxu0 0.0
    %903 = vmatpush1.msra.mxu0 0.0
    %904 = vmatprep.mubr.f32.mxu0 0.0
    %905 = vmatmul.mubr.f32.gmra.mrb[0].mxu0 %v832
    %v906 = vpop.f32.mrb[0].mxu0
    %v907 = vadd.f32 %v814, %v906
    %v908 = vpop.f32.mrb[0].mxu0
    %909 = vmatprep.mubr.f32.mxu0 0.0
    %910 = vmatmul.mubr.f32.gmra.mrb[0].mxu0 %v834
    %v911 = vpop.f32.mrb[0].mxu0
    %v912 = vadd.f32 %v819, %v911
    %v913 = vpop.f32.mrb[0].mxu0
    %914 = vmatprep.mubr.f32.mxu0 0.0
    %915 = vmatmul.mubr.f32.gmra.mrb[0].mxu0 %v836
    %v916 = vpop.f32.mrb[0].mxu0
    %v917 = vadd.f32 %v824, %v916
    %v918 = vpop.f32.mrb[0].mxu0
    %919 = vmatprep.mubr.f32.mxu0 0.0
    %920 = vmatmul.mubr.f32.gmra.mrb[0].mxu0 %v838
    %v921 = vpop.f32.mrb[0].mxu0
    %v922 = vadd.f32 %v829, %v921
    %v923 = vpop.f32.mrb[0].mxu0
    %924 = vdwg.mxu0
    %v925 = vmax.f32 %v907, 0.0
    %v926 = vmax.f32 %v912, 0.0
    %v927 = vmax.f32 %v917, 0.0
    %v928 = vmax.f32 %v922, 0.0
    %v929 = vld [vmem:[#allocation3 + $0x70] sm:$0xff]
    %v930 = vld [vmem:[#allocation3 + $0x78] sm:$0xff]
    %932 = vset.pattern.permute.xlu0 32
    %933 = vperm.xlu0 %932, %v929
    %v934 = vpop.permute.xlu0 %933
    %937 = vset.pattern.permute.xlu0 32
    %938 = vperm.xlu0 %937, %v930
    %v939 = vpop.permute.xlu0 %938
    %vm941 = vcmask 261120
    %v942 = vsel %vm941, %v929, 0
    %v944 = vsel %vm941, %v930, 0
    %946 = vmatprep.subr.mxu0 0.0
    %947 = vmatpush1.msra.mxu0 %v925
    %948 = vmatprep.subr.mxu0 0.0
    %949 = vmatpush1.msra.mxu0 %v926
    %950 = vmatprep.subr.mxu0 0.0
    %951 = vmatpush1.msra.mxu0 %v927
    %952 = vmatprep.subr.mxu0 0.0
    %953 = vmatpush1.msra.mxu0 %v928
    %954 = vmatprep.subr.mxu0 0.0
    %955 = vmatpush1.msra.mxu0 0.0
    %956 = vmatprep.subr.mxu0 0.0
    %957 = vmatpush1.msra.mxu0 0.0
    %958 = vmatprep.subr.mxu0 0.0
    %959 = vmatpush1.msra.mxu0 0.0
    %960 = vmatprep.subr.mxu0 0.0
    %961 = vmatpush1.msra.mxu0 0.0
    %962 = vmatprep.subr.mxu0 0.0
    %963 = vmatpush1.msra.mxu0 0.0
    %964 = vmatprep.subr.mxu0 0.0
    %965 = vmatpush1.msra.mxu0 0.0
    %966 = vmatprep.subr.mxu0 0.0
    %967 = vmatpush1.msra.mxu0 0.0
    %968 = vmatprep.subr.mxu0 0.0
    %969 = vmatpush1.msra.mxu0 0.0
    %970 = vmatprep.subr.mxu0 0.0
    %971 = vmatpush1.msra.mxu0 0.0
    %972 = vmatprep.subr.mxu0 0.0
    %973 = vmatpush1.msra.mxu0 0.0
    %974 = vmatprep.subr.mxu0 0.0
    %975 = vmatpush1.msra.mxu0 0.0
    %976 = vmatprep.subr.mxu0 0.0
    %977 = vmatpush1.msra.mxu0 0.0
    %978 = vmatprep.subr.mxu0 0.0
    %979 = vmatpush1.msra.mxu0 0.0
    %980 = vmatprep.subr.mxu0 0.0
    %981 = vmatpush1.msra.mxu0 0.0
    %982 = vmatprep.subr.mxu0 0.0
    %983 = vmatpush1.msra.mxu0 0.0
    %984 = vmatprep.subr.mxu0 0.0
    %985 = vmatpush1.msra.mxu0 0.0
    %986 = vmatprep.subr.mxu0 0.0
    %987 = vmatpush1.msra.mxu0 0.0
    %988 = vmatprep.subr.mxu0 0.0
    %989 = vmatpush1.msra.mxu0 0.0
    %990 = vmatprep.subr.mxu0 0.0
    %991 = vmatpush1.msra.mxu0 0.0
    %992 = vmatprep.subr.mxu0 0.0
    %993 = vmatpush1.msra.mxu0 0.0
    %994 = vmatprep.subr.mxu0 0.0
    %995 = vmatpush1.msra.mxu0 0.0
    %996 = vmatprep.subr.mxu0 0.0
    %997 = vmatpush1.msra.mxu0 0.0
    %998 = vmatprep.subr.mxu0 0.0
    %999 = vmatpush1.msra.mxu0 0.0
    %1000 = vmatprep.subr.mxu0 0.0
    %1001 = vmatpush1.msra.mxu0 0.0
    %1002 = vmatprep.subr.mxu0 0.0
    %1003 = vmatpush1.msra.mxu0 0.0
    %1004 = vmatprep.subr.mxu0 0.0
    %1005 = vmatpush1.msra.mxu0 0.0
    %1006 = vmatprep.subr.mxu0 0.0
    %1007 = vmatpush1.msra.mxu0 0.0
    %1008 = vmatprep.subr.mxu0 0.0
    %1009 = vmatpush1.msra.mxu0 0.0
    %1010 = vmatprep.mubr.f32.mxu0 0.0
    %1011 = vmatmul.mubr.f32.gmra.mrb[0].mxu0 %v942
    %v1012 = vpop.f32.mrb[0].mxu0
    %v1013 = vadd.f32 %v934, %v1012
    %v1014 = vpop.f32.mrb[0].mxu0
    %1015 = vmatprep.mubr.f32.mxu0 0.0
    %1016 = vmatmul.mubr.f32.gmra.mrb[0].mxu0 %v944
    %v1017 = vpop.f32.mrb[0].mxu0
    %v1018 = vadd.f32 %v939, %v1017
    %v1019 = vpop.f32.mrb[0].mxu0
    %1020 = vdwg.mxu0
    %v1021 = vld [vmem:[#allocation3 + $0x80] sm:$0xff]
    %v1022 = vld [vmem:[#allocation3 + $0x88] sm:$0xff]
    %v1023 = vld [vmem:[#allocation3 + $0x90] sm:$0xff]
    %v1024 = vld [vmem:[#allocation3 + $0x98] sm:$0xff]
    %v1025 = vld [vmem:[#allocation3 + $0xa0] sm:$0xff]
    %v1026 = vld [vmem:[#allocation3 + $0xa8] sm:$0xff]
    %v1027 = vld [vmem:[#allocation3 + $0xb0] sm:$0xff]
    %v1028 = vld [vmem:[#allocation3 + $0xb8] sm:$0xff]
    %1030 = vset.pattern.permute.xlu0 16
    %1031 = vperm.xlu0 %1030, %v1021
    %v1032 = vpop.permute.xlu0 %1031
    %1035 = vset.pattern.permute.xlu0 16
    %1036 = vperm.xlu0 %1035, %v1022
    %v1037 = vpop.permute.xlu0 %1036
    %1040 = vset.pattern.permute.xlu0 16
    %1041 = vperm.xlu0 %1040, %v1023
    %v1042 = vpop.permute.xlu0 %1041
    %1045 = vset.pattern.permute.xlu0 16
    %1046 = vperm.xlu0 %1045, %v1024
    %v1047 = vpop.permute.xlu0 %1046
    %1050 = vset.pattern.permute.xlu0 16
    %1051 = vperm.xlu0 %1050, %v1025
    %v1052 = vpop.permute.xlu0 %1051
    %1055 = vset.pattern.permute.xlu0 16
    %1056 = vperm.xlu0 %1055, %v1026
    %v1057 = vpop.permute.xlu0 %1056
    %1060 = vset.pattern.permute.xlu0 16
    %1061 = vperm.xlu0 %1060, %v1027
    %v1062 = vpop.permute.xlu0 %1061
    %1065 = vset.pattern.permute.xlu0 16
    %1066 = vperm.xlu0 %1065, %v1028
    %v1067 = vpop.permute.xlu0 %1066
    %v1069 = vsel %vm831, %v1021, 0
    %v1071 = vsel %vm831, %v1022, 0
    %v1073 = vsel %vm831, %v1023, 0
    %v1075 = vsel %vm831, %v1024, 0
    %v1077 = vsel %vm831, %v1025, 0
    %v1079 = vsel %vm831, %v1026, 0
    %v1081 = vsel %vm831, %v1027, 0
    %v1083 = vsel %vm831, %v1028, 0
    %1085 = vmatprep.subr.mxu0 0.0
    %1086 = vmatpush1.msra.mxu0 %v1013
    %1087 = vmatprep.subr.mxu0 0.0
    %1088 = vmatpush1.msra.mxu0 %v1018
    %1089 = vmatprep.subr.mxu0 0.0
    %1090 = vmatpush1.msra.mxu0 0.0
    %1091 = vmatprep.subr.mxu0 0.0
    %1092 = vmatpush1.msra.mxu0 0.0
    %1093 = vmatprep.subr.mxu0 0.0
    %1094 = vmatpush1.msra.mxu0 0.0
    %1095 = vmatprep.subr.mxu0 0.0
    %1096 = vmatpush1.msra.mxu0 0.0
    %1097 = vmatprep.subr.mxu0 0.0
    %1098 = vmatpush1.msra.mxu0 0.0
    %1099 = vmatprep.subr.mxu0 0.0
    %1100 = vmatpush1.msra.mxu0 0.0
    %1101 = vmatprep.subr.mxu0 0.0
    %1102 = vmatpush1.msra.mxu0 0.0
    %1103 = vmatprep.subr.mxu0 0.0
    %1104 = vmatpush1.msra.mxu0 0.0
    %1105 = vmatprep.subr.mxu0 0.0
    %1106 = vmatpush1.msra.mxu0 0.0
    %1107 = vmatprep.subr.mxu0 0.0
    %1108 = vmatpush1.msra.mxu0 0.0
    %1109 = vmatprep.subr.mxu0 0.0
    %1110 = vmatpush1.msra.mxu0 0.0
    %1111 = vmatprep.subr.mxu0 0.0
    %1112 = vmatpush1.msra.mxu0 0.0
    %1113 = vmatprep.subr.mxu0 0.0
    %1114 = vmatpush1.msra.mxu0 0.0
    %1115 = vmatprep.subr.mxu0 0.0
    %1116 = vmatpush1.msra.mxu0 0.0
    %1117 = vmatprep.subr.mxu0 0.0
    %1118 = vmatpush1.msra.mxu0 0.0
    %1119 = vmatprep.subr.mxu0 0.0
    %1120 = vmatpush1.msra.mxu0 0.0
    %1121 = vmatprep.subr.mxu0 0.0
    %1122 = vmatpush1.msra.mxu0 0.0
    %1123 = vmatprep.subr.mxu0 0.0
    %1124 = vmatpush1.msra.mxu0 0.0
    %1125 = vmatprep.subr.mxu0 0.0
    %1126 = vmatpush1.msra.mxu0 0.0
    %1127 = vmatprep.subr.mxu0 0.0
    %1128 = vmatpush1.msra.mxu0 0.0
    %1129 = vmatprep.subr.mxu0 0.0
    %1130 = vmatpush1.msra.mxu0 0.0
    %1131 = vmatprep.subr.mxu0 0.0
    %1132 = vmatpush1.msra.mxu0 0.0
    %1133 = vmatprep.subr.mxu0 0.0
    %1134 = vmatpush1.msra.mxu0 0.0
    %1135 = vmatprep.subr.mxu0 0.0
    %1136 = vmatpush1.msra.mxu0 0.0
    %1137 = vmatprep.subr.mxu0 0.0
    %1138 = vmatpush1.msra.mxu0 0.0
    %1139 = vmatprep.subr.mxu0 0.0
    %1140 = vmatpush1.msra.mxu0 0.0
    %1141 = vmatprep.subr.mxu0 0.0
    %1142 = vmatpush1.msra.mxu0 0.0
    %1143 = vmatprep.subr.mxu0 0.0
    %1144 = vmatpush1.msra.mxu0 0.0
    %1145 = vmatprep.subr.mxu0 0.0
    %1146 = vmatpush1.msra.mxu0 0.0
    %1147 = vmatprep.subr.mxu0 0.0
    %1148 = vmatpush1.msra.mxu0 0.0
    %1149 = vmatprep.mubr.f32.mxu0 0.0
    %1150 = vmatmul.mubr.f32.gmra.mrb[0].mxu0 %v1069
    %v1151 = vpop.f32.mrb[0].mxu0
    %v1152 = vadd.f32 %v1032, %v1151
    %v1153 = vpop.f32.mrb[0].mxu0
    %1154 = vmatprep.mubr.f32.mxu0 0.0
    %1155 = vmatmul.mubr.f32.gmra.mrb[0].mxu0 %v1071
    %v1156 = vpop.f32.mrb[0].mxu0
    %v1157 = vadd.f32 %v1037, %v1156
    %v1158 = vpop.f32.mrb[0].mxu0
    %1159 = vmatprep.mubr.f32.mxu0 0.0
    %1160 = vmatmul.mubr.f32.gmra.mrb[0].mxu0 %v1073
    %v1161 = vpop.f32.mrb[0].mxu0
    %v1162 = vadd.f32 %v1042, %v1161
    %v1163 = vpop.f32.mrb[0].mxu0
    %1164 = vmatprep.mubr.f32.mxu0 0.0
    %1165 = vmatmul.mubr.f32.gmra.mrb[0].mxu0 %v1075
    %v1166 = vpop.f32.mrb[0].mxu0
    %v1167 = vadd.f32 %v1047, %v1166
    %v1168 = vpop.f32.mrb[0].mxu0
    %1169 = vmatprep.mubr.f32.mxu0 0.0
    %1170 = vmatmul.mubr.f32.gmra.mrb[0].mxu0 %v1077
    %v1171 = vpop.f32.mrb[0].mxu0
    %v1172 = vadd.f32 %v1052, %v1171
    %v1173 = vpop.f32.mrb[0].mxu0
    %1174 = vmatprep.mubr.f32.mxu0 0.0
    %1175 = vmatmul.mubr.f32.gmra.mrb[0].mxu0 %v1079
    %v1176 = vpop.f32.mrb[0].mxu0
    %v1177 = vadd.f32 %v1057, %v1176
    %v1178 = vpop.f32.mrb[0].mxu0
    %1179 = vmatprep.mubr.f32.mxu0 0.0
    %1180 = vmatmul.mubr.f32.gmra.mrb[0].mxu0 %v1081
    %v1181 = vpop.f32.mrb[0].mxu0
    %v1182 = vadd.f32 %v1062, %v1181
    %v1183 = vpop.f32.mrb[0].mxu0
    %1184 = vmatprep.mubr.f32.mxu0 0.0
    %1185 = vmatmul.mubr.f32.gmra.mrb[0].mxu0 %v1083
    %v1186 = vpop.f32.mrb[0].mxu0
    %v1187 = vadd.f32 %v1067, %v1186
    %v1188 = vpop.f32.mrb[0].mxu0
    %1189 = vdwg.mxu0
    %v1190 = vmax.f32 %v1152, 0.0
    %v1191 = vmax.f32 %v1157, 0.0
    %v1192 = vmax.f32 %v1162, 0.0
    %v1193 = vmax.f32 %v1167, 0.0
    %v1194 = vmax.f32 %v1172, 0.0
    %v1195 = vmax.f32 %v1177, 0.0
    %v1196 = vmax.f32 %v1182, 0.0
    %v1197 = vmax.f32 %v1187, 0.0
    %v1198 = vmul.f32 %v1190, %v44
    %v1199 = vmul.f32 %v1191, %v44
    %v1200 = vmul.f32 %v1192, %v44
    %v1201 = vmul.f32 %v1193, %v44
    %v1202 = vmul.f32 %v1194, %v44
    %v1203 = vmul.f32 %v1195, %v44
    %v1204 = vmul.f32 %v1196, %v44
    %v1205 = vmul.f32 %v1197, %v44
    %v1206 = vsel %vm632, %v1198, 0.0
    %1207 = vadd.xlane.f32.xlu0 %v1206
    %v1208 = vpop.xlane.xlu0 %1207
    %v1209 = vsel %vm632, %v1199, 0.0
    %1210 = vadd.xlane.f32.xlu0 %v1209
    %v1211 = vpop.xlane.xlu0 %1210
    %v1212 = vsel %vm632, %v1200, 0.0
    %1213 = vadd.xlane.f32.xlu0 %v1212
    %v1214 = vpop.xlane.xlu0 %1213
    %v1215 = vsel %vm632, %v1201, 0.0
    %1216 = vadd.xlane.f32.xlu0 %v1215
    %v1217 = vpop.xlane.xlu0 %1216
    %v1218 = vsel %vm632, %v1202, 0.0
    %1219 = vadd.xlane.f32.xlu0 %v1218
    %v1220 = vpop.xlane.xlu0 %1219
    %v1221 = vsel %vm632, %v1203, 0.0
    %1222 = vadd.xlane.f32.xlu0 %v1221
    %v1223 = vpop.xlane.xlu0 %1222
    %v1224 = vsel %vm632, %v1204, 0.0
    %1225 = vadd.xlane.f32.xlu0 %v1224
    %v1226 = vpop.xlane.xlu0 %1225
    %v1227 = vsel %vm632, %v1205, 0.0
    %1228 = vadd.xlane.f32.xlu0 %v1227
    %v1229 = vpop.xlane.xlu0 %1228
    %v1230 = vmul.f32 %v1190, %v1190
    %v1231 = vmul.f32 %v1191, %v1191
    %v1232 = vmul.f32 %v1192, %v1192
    %v1233 = vmul.f32 %v1193, %v1193
    %v1234 = vmul.f32 %v1194, %v1194
    %v1235 = vmul.f32 %v1195, %v1195
    %v1236 = vmul.f32 %v1196, %v1196
    %v1237 = vmul.f32 %v1197, %v1197
    %v1238 = vmul.f32 %v1230, %v44
    %v1239 = vmul.f32 %v1231, %v44
    %v1240 = vmul.f32 %v1232, %v44
    %v1241 = vmul.f32 %v1233, %v44
    %v1242 = vmul.f32 %v1234, %v44
    %v1243 = vmul.f32 %v1235, %v44
    %v1244 = vmul.f32 %v1236, %v44
    %v1245 = vmul.f32 %v1237, %v44
    %v1246 = vsel %vm632, %v1238, 0.0
    %1247 = vadd.xlane.f32.xlu0 %v1246
    %v1248 = vpop.xlane.xlu0 %1247
    %v1249 = vsel %vm632, %v1239, 0.0
    %1250 = vadd.xlane.f32.xlu0 %v1249
    %v1251 = vpop.xlane.xlu0 %1250
    %v1252 = vsel %vm632, %v1240, 0.0
    %1253 = vadd.xlane.f32.xlu0 %v1252
    %v1254 = vpop.xlane.xlu0 %1253
    %v1255 = vsel %vm632, %v1241, 0.0
    %1256 = vadd.xlane.f32.xlu0 %v1255
    %v1257 = vpop.xlane.xlu0 %1256
    %v1258 = vsel %vm632, %v1242, 0.0
    %1259 = vadd.xlane.f32.xlu0 %v1258
    %v1260 = vpop.xlane.xlu0 %1259
    %v1261 = vsel %vm632, %v1243, 0.0
    %1262 = vadd.xlane.f32.xlu0 %v1261
    %v1263 = vpop.xlane.xlu0 %1262
    %v1264 = vsel %vm632, %v1244, 0.0
    %1265 = vadd.xlane.f32.xlu0 %v1264
    %v1266 = vpop.xlane.xlu0 %1265
    %v1267 = vsel %vm632, %v1245, 0.0
    %1268 = vadd.xlane.f32.xlu0 %v1267
    %v1269 = vpop.xlane.xlu0 %1268
    %v1270 = vmul.f32 %v1208, 0.5
    %v1271 = vmul.f32 %v1211, 0.5
    %v1272 = vmul.f32 %v1214, 0.5
    %v1273 = vmul.f32 %v1217, 0.5
    %v1274 = vmul.f32 %v1220, 0.5
    %v1275 = vmul.f32 %v1223, 0.5
    %v1276 = vmul.f32 %v1226, 0.5
    %v1277 = vmul.f32 %v1229, 0.5
    %v1278 = vmul.f32 %v1248, 0.5
    %v1279 = vmul.f32 %v1251, 0.5
    %v1280 = vmul.f32 %v1254, 0.5
    %v1281 = vmul.f32 %v1257, 0.5
    %v1282 = vmul.f32 %v1260, 0.5
    %v1283 = vmul.f32 %v1263, 0.5
    %v1284 = vmul.f32 %v1266, 0.5
    %v1285 = vmul.f32 %v1269, 0.5
    %v1286 = vmul.f32 %v1270, %v1270
    %v1287 = vmul.f32 %v1271, %v1271
    %v1288 = vmul.f32 %v1272, %v1272
    %v1289 = vmul.f32 %v1273, %v1273
    %v1290 = vmul.f32 %v1274, %v1274
    %v1291 = vmul.f32 %v1275, %v1275
    %v1292 = vmul.f32 %v1276, %v1276
    %v1293 = vmul.f32 %v1277, %v1277
    %v1294 = vsub.f32 %v1278, %v1286
    %v1295 = vsub.f32 %v1279, %v1287
    %v1296 = vsub.f32 %v1280, %v1288
    %v1297 = vsub.f32 %v1281, %v1289
    %v1298 = vsub.f32 %v1282, %v1290
    %v1299 = vsub.f32 %v1283, %v1291
    %v1300 = vsub.f32 %v1284, %v1292
    %v1301 = vsub.f32 %v1285, %v1293
    %v1302 = vmax.f32 %v1294, 0.0
    %v1303 = vmax.f32 %v1295, 0.0
    %v1304 = vmax.f32 %v1296, 0.0
    %v1305 = vmax.f32 %v1297, 0.0
    %v1306 = vmax.f32 %v1298, 0.0
    %v1307 = vmax.f32 %v1299, 0.0
    %v1308 = vmax.f32 %v1300, 0.0
    %v1309 = vmax.f32 %v1301, 0.0
    %v1310 = vsub.f32 %v1190, %v1270
    %v1311 = vsub.f32 %v1191, %v1271
    %v1312 = vsub.f32 %v1192, %v1272
    %v1313 = vsub.f32 %v1193, %v1273
    %v1314 = vsub.f32 %v1194, %v1274
    %v1315 = vsub.f32 %v1195, %v1275
    %v1316 = vsub.f32 %v1196, %v1276
    %v1317 = vsub.f32 %v1197, %v1277
    %v1318 = vadd.f32 %v1302, 1e-05
    %v1319 = vadd.f32 %v1303, 1e-05
    %v1320 = vadd.f32 %v1304, 1e-05
    %v1321 = vadd.f32 %v1305, 1e-05
    %v1322 = vadd.f32 %v1306, 1e-05
    %v1323 = vadd.f32 %v1307, 1e-05
    %v1324 = vadd.f32 %v1308, 1e-05
    %v1325 = vadd.f32 %v1309, 1e-05
    %v1326 = vrsqrt.pop %v1318
    %v1327 = vrsqrt.pop %v1319
    %v1328 = vrsqrt.pop %v1320
    %v1329 = vrsqrt.pop %v1321
    %v1330 = vrsqrt.pop %v1322
    %v1331 = vrsqrt.pop %v1323
    %v1332 = vrsqrt.pop %v1324
    %v1333 = vrsqrt.pop %v1325
    %v1334 = vmul.f32 %v1310, %v1326
    %v1335 = vmul.f32 %v1311, %v1327
    %v1336 = vmul.f32 %v1312, %v1328
    %v1337 = vmul.f32 %v1313, %v1329
    %v1338 = vmul.f32 %v1314, %v1330
    %v1339 = vmul.f32 %v1315, %v1331
    %v1340 = vmul.f32 %v1316, %v1332
    %v1341 = vmul.f32 %v1317, %v1333
    %v1342 = vld [vmem:[#allocation3 + $0xc0] sm:$0xff]
    %v1343 = vld [vmem:[#allocation3 + $0xc8] sm:$0xff]
    %v1344 = vld [vmem:[#allocation3 + $0xd0] sm:$0xff]
    %v1345 = vld [vmem:[#allocation3 + $0xd8] sm:$0xff]
    %v1346 = vld [vmem:[#allocation3 + $0xe0] sm:$0xff]
    %v1347 = vld [vmem:[#allocation3 + $0xe8] sm:$0xff]
    %v1348 = vld [vmem:[#allocation3 + $0xf0] sm:$0xff]
    %v1349 = vld [vmem:[#allocation3 + $0xf8] sm:$0xff]
    %1351 = vset.pattern.permute.xlu0 64
    %1352 = vperm.xlu0 %1351, %v1342
    %v1353 = vpop.permute.xlu0 %1352
    %1356 = vset.pattern.permute.xlu0 64
    %1357 = vperm.xlu0 %1356, %v1343
    %v1358 = vpop.permute.xlu0 %1357
    %1361 = vset.pattern.permute.xlu0 64
    %1362 = vperm.xlu0 %1361, %v1344
    %v1363 = vpop.permute.xlu0 %1362
    %1366 = vset.pattern.permute.xlu0 64
    %1367 = vperm.xlu0 %1366, %v1345
    %v1368 = vpop.permute.xlu0 %1367
    %1371 = vset.pattern.permute.xlu0 64
    %1372 = vperm.xlu0 %1371, %v1346
    %v1373 = vpop.permute.xlu0 %1372
    %1376 = vset.pattern.permute.xlu0 64
    %1377 = vperm.xlu0 %1376, %v1347
    %v1378 = vpop.permute.xlu0 %1377
    %1381 = vset.pattern.permute.xlu0 64
    %1382 = vperm.xlu0 %1381, %v1348
    %v1383 = vpop.permute.xlu0 %1382
    %1386 = vset.pattern.permute.xlu0 64
    %1387 = vperm.xlu0 %1386, %v1349
    %v1388 = vpop.permute.xlu0 %1387
    %vm1390 = vcmask 523264
    %v1391 = vsel %vm1390, %v1342, 0
    %v1393 = vsel %vm1390, %v1343, 0
    %v1395 = vsel %vm1390, %v1344, 0
    %v1397 = vsel %vm1390, %v1345, 0
    %v1399 = vsel %vm1390, %v1346, 0
    %v1401 = vsel %vm1390, %v1347, 0
    %v1403 = vsel %vm1390, %v1348, 0
    %v1405 = vsel %vm1390, %v1349, 0
    %1407 = vmatprep.subr.mxu0 0.0
    %1408 = vmatpush1.msra.mxu0 %v1334
    %1409 = vmatprep.subr.mxu0 0.0
    %1410 = vmatpush1.msra.mxu0 %v1335
    %1411 = vmatprep.subr.mxu0 0.0
    %1412 = vmatpush1.msra.mxu0 %v1336
    %1413 = vmatprep.subr.mxu0 0.0
    %1414 = vmatpush1.msra.mxu0 %v1337
    %1415 = vmatprep.subr.mxu0 0.0
    %1416 = vmatpush1.msra.mxu0 %v1338
    %1417 = vmatprep.subr.mxu0 0.0
    %1418 = vmatpush1.msra.mxu0 %v1339
    %1419 = vmatprep.subr.mxu0 0.0
    %1420 = vmatpush1.msra.mxu0 %v1340
    %1421 = vmatprep.subr.mxu0 0.0
    %1422 = vmatpush1.msra.mxu0 %v1341
    %1423 = vmatprep.subr.mxu0 0.0
    %1424 = vmatpush1.msra.mxu0 0.0
    %1425 = vmatprep.subr.mxu0 0.0
    %1426 = vmatpush1.msra.mxu0 0.0
    %1427 = vmatprep.subr.mxu0 0.0
    %1428 = vmatpush1.msra.mxu0 0.0
    %1429 = vmatprep.subr.mxu0 0.0
    %1430 = vmatpush1.msra.mxu0 0.0
    %1431 = vmatprep.subr.mxu0 0.0
    %1432 = vmatpush1.msra.mxu0 0.0
    %1433 = vmatprep.subr.mxu0 0.0
    %1434 = vmatpush1.msra.mxu0 0.0
    %1435 = vmatprep.subr.mxu0 0.0
    %1436 = vmatpush1.msra.mxu0 0.0
    %1437 = vmatprep.subr.mxu0 0.0
    %1438 = vmatpush1.msra.mxu0 0.0
    %1439 = vmatprep.subr.mxu0 0.0
    %1440 = vmatpush1.msra.mxu0 0.0
    %1441 = vmatprep.subr.mxu0 0.0
    %1442 = vmatpush1.msra.mxu0 0.0
    %1443 = vmatprep.subr.mxu0 0.0
    %1444 = vmatpush1.msra.mxu0 0.0
    %1445 = vmatprep.subr.mxu0 0.0
    %1446 = vmatpush1.msra.mxu0 0.0
    %1447 = vmatprep.subr.mxu0 0.0
    %1448 = vmatpush1.msra.mxu0 0.0
    %1449 = vmatprep.subr.mxu0 0.0
    %1450 = vmatpush1.msra.mxu0 0.0
    %1451 = vmatprep.subr.mxu0 0.0
    %1452 = vmatpush1.msra.mxu0 0.0
    %1453 = vmatprep.subr.mxu0 0.0
    %1454 = vmatpush1.msra.mxu0 0.0
    %1455 = vmatprep.subr.mxu0 0.0
    %1456 = vmatpush1.msra.mxu0 0.0
    %1457 = vmatprep.subr.mxu0 0.0
    %1458 = vmatpush1.msra.mxu0 0.0
    %1459 = vmatprep.subr.mxu0 0.0
    %1460 = vmatpush1.msra.mxu0 0.0
    %1461 = vmatprep.subr.mxu0 0.0
    %1462 = vmatpush1.msra.mxu0 0.0
    %1463 = vmatprep.subr.mxu0 0.0
    %1464 = vmatpush1.msra.mxu0 0.0
    %1465 = vmatprep.subr.mxu0 0.0
    %1466 = vmatpush1.msra.mxu0 0.0
    %1467 = vmatprep.subr.mxu0 0.0
    %1468 = vmatpush1.msra.mxu0 0.0
    %1469 = vmatprep.subr.mxu0 0.0
    %1470 = vmatpush1.msra.mxu0 0.0
    %1471 = vmatprep.mubr.f32.mxu0 0.0
    %1472 = vmatmul.mubr.f32.gmra.mrb[0].mxu0 %v1391
    %v1473 = vpop.f32.mrb[0].mxu0
    %v1474 = vadd.f32 %v1353, %v1473
    %v1475 = vpop.f32.mrb[0].mxu0
    %1476 = vmatprep.mubr.f32.mxu0 0.0
    %1477 = vmatmul.mubr.f32.gmra.mrb[0].mxu0 %v1393
    %v1478 = vpop.f32.mrb[0].mxu0
    %v1479 = vadd.f32 %v1358, %v1478
    %v1480 = vpop.f32.mrb[0].mxu0
    %1481 = vmatprep.mubr.f32.mxu0 0.0
    %1482 = vmatmul.mubr.f32.gmra.mrb[0].mxu0 %v1395
    %v1483 = vpop.f32.mrb[0].mxu0
    %v1484 = vadd.f32 %v1363, %v1483
    %v1485 = vpop.f32.mrb[0].mxu0
    %1486 = vmatprep.mubr.f32.mxu0 0.0
    %1487 = vmatmul.mubr.f32.gmra.mrb[0].mxu0 %v1397
    %v1488 = vpop.f32.mrb[0].mxu0
    %v1489 = vadd.f32 %v1368, %v1488
    %v1490 = vpop.f32.mrb[0].mxu0
    %1491 = vmatprep.mubr.f32.mxu0 0.0
    %1492 = vmatmul.mubr.f32.gmra.mrb[0].mxu0 %v1399
    %v1493 = vpop.f32.mrb[0].mxu0
    %v1494 = vadd.f32 %v1373, %v1493
    %v1495 = vpop.f32.mrb[0].mxu0
    %1496 = vmatprep.mubr.f32.mxu0 0.0
    %1497 = vmatmul.mubr.f32.gmra.mrb[0].mxu0 %v1401
    %v1498 = vpop.f32.mrb[0].mxu0
    %v1499 = vadd.f32 %v1378, %v1498
    %v1500 = vpop.f32.mrb[0].mxu0
    %1501 = vmatprep.mubr.f32.mxu0 0.0
    %1502 = vmatmul.mubr.f32.gmra.mrb[0].mxu0 %v1403
    %v1503 = vpop.f32.mrb[0].mxu0
    %v1504 = vadd.f32 %v1383, %v1503
    %v1505 = vpop.f32.mrb[0].mxu0
    %1506 = vmatprep.mubr.f32.mxu0 0.0
    %1507 = vmatmul.mubr.f32.gmra.mrb[0].mxu0 %v1405
    %v1508 = vpop.f32.mrb[0].mxu0
    %v1509 = vadd.f32 %v1388, %v1508
    %v1510 = vpop.f32.mrb[0].mxu0
    %1511 = vdwg.mxu0
    %v1512 = vmax.f32 %v1474, 0.0
    %v1513 = vmax.f32 %v1479, 0.0
    %v1514 = vmax.f32 %v1484, 0.0
    %v1515 = vmax.f32 %v1489, 0.0
    %v1516 = vmax.f32 %v1494, 0.0
    %v1517 = vmax.f32 %v1499, 0.0
    %v1518 = vmax.f32 %v1504, 0.0
    %v1519 = vmax.f32 %v1509, 0.0
    %v1520 = vmul.f32 %v1512, %v44
    %v1521 = vmul.f32 %v1513, %v44
    %v1522 = vmul.f32 %v1514, %v44
    %v1523 = vmul.f32 %v1515, %v44
    %v1524 = vmul.f32 %v1516, %v44
    %v1525 = vmul.f32 %v1517, %v44
    %v1526 = vmul.f32 %v1518, %v44
    %v1527 = vmul.f32 %v1519, %v44
    %v1528 = vsel %vm632, %v1520, 0.0
    %1529 = vadd.xlane.f32.xlu0 %v1528
    %v1530 = vpop.xlane.xlu0 %1529
    %v1531 = vsel %vm632, %v1521, 0.0
    %1532 = vadd.xlane.f32.xlu0 %v1531
    %v1533 = vpop.xlane.xlu0 %1532
    %v1534 = vsel %vm632, %v1522, 0.0
    %1535 = vadd.xlane.f32.xlu0 %v1534
    %v1536 = vpop.xlane.xlu0 %1535
    %v1537 = vsel %vm632, %v1523, 0.0
    %1538 = vadd.xlane.f32.xlu0 %v1537
    %v1539 = vpop.xlane.xlu0 %1538
    %v1540 = vsel %vm632, %v1524, 0.0
    %1541 = vadd.xlane.f32.xlu0 %v1540
    %v1542 = vpop.xlane.xlu0 %1541
    %v1543 = vsel %vm632, %v1525, 0.0
    %1544 = vadd.xlane.f32.xlu0 %v1543
    %v1545 = vpop.xlane.xlu0 %1544
    %v1546 = vsel %vm632, %v1526, 0.0
    %1547 = vadd.xlane.f32.xlu0 %v1546
    %v1548 = vpop.xlane.xlu0 %1547
    %v1549 = vsel %vm632, %v1527, 0.0
    %1550 = vadd.xlane.f32.xlu0 %v1549
    %v1551 = vpop.xlane.xlu0 %1550
    %v1552 = vmul.f32 %v1512, %v1512
    %v1553 = vmul.f32 %v1513, %v1513
    %v1554 = vmul.f32 %v1514, %v1514
    %v1555 = vmul.f32 %v1515, %v1515
    %v1556 = vmul.f32 %v1516, %v1516
    %v1557 = vmul.f32 %v1517, %v1517
    %v1558 = vmul.f32 %v1518, %v1518
    %v1559 = vmul.f32 %v1519, %v1519
    %v1560 = vmul.f32 %v1552, %v44
    %v1561 = vmul.f32 %v1553, %v44
    %v1562 = vmul.f32 %v1554, %v44
    %v1563 = vmul.f32 %v1555, %v44
    %v1564 = vmul.f32 %v1556, %v44
    %v1565 = vmul.f32 %v1557, %v44
    %v1566 = vmul.f32 %v1558, %v44
    %v1567 = vmul.f32 %v1559, %v44
    %v1568 = vsel %vm632, %v1560, 0.0
    %1569 = vadd.xlane.f32.xlu0 %v1568
    %v1570 = vpop.xlane.xlu0 %1569
    %v1571 = vsel %vm632, %v1561, 0.0
    %1572 = vadd.xlane.f32.xlu0 %v1571
    %v1573 = vpop.xlane.xlu0 %1572
    %v1574 = vsel %vm632, %v1562, 0.0
    %1575 = vadd.xlane.f32.xlu0 %v1574
    %v1576 = vpop.xlane.xlu0 %1575
    %v1577 = vsel %vm632, %v1563, 0.0
    %1578 = vadd.xlane.f32.xlu0 %v1577
    %v1579 = vpop.xlane.xlu0 %1578
    %v1580 = vsel %vm632, %v1564, 0.0
    %1581 = vadd.xlane.f32.xlu0 %v1580
    %v1582 = vpop.xlane.xlu0 %1581
    %v1583 = vsel %vm632, %v1565, 0.0
    %1584 = vadd.xlane.f32.xlu0 %v1583
    %v1585 = vpop.xlane.xlu0 %1584
    %v1586 = vsel %vm632, %v1566, 0.0
    %1587 = vadd.xlane.f32.xlu0 %v1586
    %v1588 = vpop.xlane.xlu0 %1587
    %v1589 = vsel %vm632, %v1567, 0.0
    %1590 = vadd.xlane.f32.xlu0 %v1589
    %v1591 = vpop.xlane.xlu0 %1590
    %v1592 = vmul.f32 %v1530, 0.5
    %v1593 = vmul.f32 %v1533, 0.5
    %v1594 = vmul.f32 %v1536, 0.5
    %v1595 = vmul.f32 %v1539, 0.5
    %v1596 = vmul.f32 %v1542, 0.5
    %v1597 = vmul.f32 %v1545, 0.5
    %v1598 = vmul.f32 %v1548, 0.5
    %v1599 = vmul.f32 %v1551, 0.5
    %v1600 = vmul.f32 %v1570, 0.5
    %v1601 = vmul.f32 %v1573, 0.5
    %v1602 = vmul.f32 %v1576, 0.5
    %v1603 = vmul.f32 %v1579, 0.5
    %v1604 = vmul.f32 %v1582, 0.5
    %v1605 = vmul.f32 %v1585, 0.5
    %v1606 = vmul.f32 %v1588, 0.5
    %v1607 = vmul.f32 %v1591, 0.5
    %v1608 = vmul.f32 %v1592, %v1592
    %v1609 = vmul.f32 %v1593, %v1593
    %v1610 = vmul.f32 %v1594, %v1594
    %v1611 = vmul.f32 %v1595, %v1595
    %v1612 = vmul.f32 %v1596, %v1596
    %v1613 = vmul.f32 %v1597, %v1597
    %v1614 = vmul.f32 %v1598, %v1598
    %v1615 = vmul.f32 %v1599, %v1599
    %v1616 = vsub.f32 %v1600, %v1608
    %v1617 = vsub.f32 %v1601, %v1609
    %v1618 = vsub.f32 %v1602, %v1610
    %v1619 = vsub.f32 %v1603, %v1611
    %v1620 = vsub.f32 %v1604, %v1612
    %v1621 = vsub.f32 %v1605, %v1613
    %v1622 = vsub.f32 %v1606, %v1614
    %v1623 = vsub.f32 %v1607, %v1615
    %v1624 = vmax.f32 %v1616, 0.0
    %v1625 = vmax.f32 %v1617, 0.0
    %v1626 = vmax.f32 %v1618, 0.0
    %v1627 = vmax.f32 %v1619, 0.0
    %v1628 = vmax.f32 %v1620, 0.0
    %v1629 = vmax.f32 %v1621, 0.0
    %v1630 = vmax.f32 %v1622, 0.0
    %v1631 = vmax.f32 %v1623, 0.0
    %v1632 = vsub.f32 %v1512, %v1592
    %v1633 = vsub.f32 %v1513, %v1593
    %v1634 = vsub.f32 %v1514, %v1594
    %v1635 = vsub.f32 %v1515, %v1595
    %v1636 = vsub.f32 %v1516, %v1596
    %v1637 = vsub.f32 %v1517, %v1597
    %v1638 = vsub.f32 %v1518, %v1598
    %v1639 = vsub.f32 %v1519, %v1599
    %v1640 = vadd.f32 %v1624, 1e-05
    %v1641 = vadd.f32 %v1625, 1e-05
    %v1642 = vadd.f32 %v1626, 1e-05
    %v1643 = vadd.f32 %v1627, 1e-05
    %v1644 = vadd.f32 %v1628, 1e-05
    %v1645 = vadd.f32 %v1629, 1e-05
    %v1646 = vadd.f32 %v1630, 1e-05
    %v1647 = vadd.f32 %v1631, 1e-05
    %v1648 = vrsqrt.pop %v1640
    %v1649 = vrsqrt.pop %v1641
    %v1650 = vrsqrt.pop %v1642
    %v1651 = vrsqrt.pop %v1643
    %v1652 = vrsqrt.pop %v1644
    %v1653 = vrsqrt.pop %v1645
    %v1654 = vrsqrt.pop %v1646
    %v1655 = vrsqrt.pop %v1647
    %v1656 = vmul.f32 %v1632, %v1648
    %v1657 = vmul.f32 %v1633, %v1649
    %v1658 = vmul.f32 %v1634, %v1650
    %v1659 = vmul.f32 %v1635, %v1651
    %v1660 = vmul.f32 %v1636, %v1652
    %v1661 = vmul.f32 %v1637, %v1653
    %v1662 = vmul.f32 %v1638, %v1654
    %v1663 = vmul.f32 %v1639, %v1655
    %v1664 = vld [vmem:[#allocation3 + $0x100] sm:$0xff]
    %v1665 = vld [vmem:[#allocation3 + $0x108] sm:$0xff]
    %1667 = vset.pattern.permute.xlu0 64
    %1668 = vperm.xlu0 %1667, %v1664
    %v1669 = vpop.permute.xlu0 %1668
    %1672 = vset.pattern.permute.xlu0 64
    %1673 = vperm.xlu0 %1672, %v1665
    %v1674 = vpop.permute.xlu0 %1673
    %v1676 = vsel %vm1390, %v1664, 0
    %v1678 = vsel %vm1390, %v1665, 0
    %1680 = vmatprep.subr.mxu0 0.0
    %1681 = vmatpush1.msra.mxu0 %v1656
    %1682 = vmatprep.subr.mxu0 0.0
    %1683 = vmatpush1.msra.mxu0 %v1657
    %1684 = vmatprep.subr.mxu0 0.0
    %1685 = vmatpush1.msra.mxu0 %v1658
    %1686 = vmatprep.subr.mxu0 0.0
    %1687 = vmatpush1.msra.mxu0 %v1659
    %1688 = vmatprep.subr.mxu0 0.0
    %1689 = vmatpush1.msra.mxu0 %v1660
    %1690 = vmatprep.subr.mxu0 0.0
    %1691 = vmatpush1.msra.mxu0 %v1661
    %1692 = vmatprep.subr.mxu0 0.0
    %1693 = vmatpush1.msra.mxu0 %v1662
    %1694 = vmatprep.subr.mxu0 0.0
    %1695 = vmatpush1.msra.mxu0 %v1663
    %1696 = vmatprep.subr.mxu0 0.0
    %1697 = vmatpush1.msra.mxu0 0.0
    %1698 = vmatprep.subr.mxu0 0.0
    %1699 = vmatpush1.msra.mxu0 0.0
    %1700 = vmatprep.subr.mxu0 0.0
    %1701 = vmatpush1.msra.mxu0 0.0
    %1702 = vmatprep.subr.mxu0 0.0
    %1703 = vmatpush1.msra.mxu0 0.0
    %1704 = vmatprep.subr.mxu0 0.0
    %1705 = vmatpush1.msra.mxu0 0.0
    %1706 = vmatprep.subr.mxu0 0.0
    %1707 = vmatpush1.msra.mxu0 0.0
    %1708 = vmatprep.subr.mxu0 0.0
    %1709 = vmatpush1.msra.mxu0 0.0
    %1710 = vmatprep.subr.mxu0 0.0
    %1711 = vmatpush1.msra.mxu0 0.0
    %1712 = vmatprep.subr.mxu0 0.0
    %1713 = vmatpush1.msra.mxu0 0.0
    %1714 = vmatprep.subr.mxu0 0.0
    %1715 = vmatpush1.msra.mxu0 0.0
    %1716 = vmatprep.subr.mxu0 0.0
    %1717 = vmatpush1.msra.mxu0 0.0
    %1718 = vmatprep.subr.mxu0 0.0
    %1719 = vmatpush1.msra.mxu0 0.0
    %1720 = vmatprep.subr.mxu0 0.0
    %1721 = vmatpush1.msra.mxu0 0.0
    %1722 = vmatprep.subr.mxu0 0.0
    %1723 = vmatpush1.msra.mxu0 0.0
    %1724 = vmatprep.subr.mxu0 0.0
    %1725 = vmatpush1.msra.mxu0 0.0
    %1726 = vmatprep.subr.mxu0 0.0
    %1727 = vmatpush1.msra.mxu0 0.0
    %1728 = vmatprep.subr.mxu0 0.0
    %1729 = vmatpush1.msra.mxu0 0.0
    %1730 = vmatprep.subr.mxu0 0.0
    %1731 = vmatpush1.msra.mxu0 0.0
    %1732 = vmatprep.subr.mxu0 0.0
    %1733 = vmatpush1.msra.mxu0 0.0
    %1734 = vmatprep.subr.mxu0 0.0
    %1735 = vmatpush1.msra.mxu0 0.0
    %1736 = vmatprep.subr.mxu0 0.0
    %1737 = vmatpush1.msra.mxu0 0.0
    %1738 = vmatprep.subr.mxu0 0.0
    %1739 = vmatpush1.msra.mxu0 0.0
    %1740 = vmatprep.subr.mxu0 0.0
    %1741 = vmatpush1.msra.mxu0 0.0
    %1742 = vmatprep.subr.mxu0 0.0
    %1743 = vmatpush1.msra.mxu0 0.0
    %1744 = vmatprep.mubr.f32.mxu0 0.0
    %1745 = vmatmul.mubr.f32.gmra.mrb[0].mxu0 %v1676
    %v1746 = vpop.f32.mrb[0].mxu0
    %v1747 = vadd.f32 %v1669, %v1746
    %v1748 = vpop.f32.mrb[0].mxu0
    %1749 = vmatprep.mubr.f32.mxu0 0.0
    %1750 = vmatmul.mubr.f32.gmra.mrb[0].mxu0 %v1678
    %v1751 = vpop.f32.mrb[0].mxu0
    %v1752 = vadd.f32 %v1674, %v1751
    %v1753 = vpop.f32.mrb[0].mxu0
    %1754 = vdwg.mxu0
    %v1755 = vld [vmem:[#allocation3 + $0x110] sm:$0xff]
    %v1756 = vld [vmem:[#allocation3 + $0x118] sm:$0xff]
    %v1757 = vld [vmem:[#allocation3 + $0x120] sm:$0xff]
    %v1758 = vld [vmem:[#allocation3 + $0x128] sm:$0xff]
    %1760 = vset.pattern.permute.xlu0 16
    %1761 = vperm.xlu0 %1760, %v1755
    %v1762 = vpop.permute.xlu0 %1761
    %1765 = vset.pattern.permute.xlu0 16
    %1766 = vperm.xlu0 %1765, %v1756
    %v1767 = vpop.permute.xlu0 %1766
    %1770 = vset.pattern.permute.xlu0 16
    %1771 = vperm.xlu0 %1770, %v1757
    %v1772 = vpop.permute.xlu0 %1771
    %1775 = vset.pattern.permute.xlu0 16
    %1776 = vperm.xlu0 %1775, %v1758
    %v1777 = vpop.permute.xlu0 %1776
    %v1779 = vsel %vm831, %v1755, 0
    %v1781 = vsel %vm831, %v1756, 0
    %v1783 = vsel %vm831, %v1757, 0
    %v1785 = vsel %vm831, %v1758, 0
    %1787 = vmatprep.subr.mxu0 0.0
    %1788 = vmatpush1.msra.mxu0 %v1013
    %1789 = vmatprep.subr.mxu0 0.0
    %1790 = vmatpush1.msra.mxu0 %v1018
    %1791 = vmatprep.subr.mxu0 0.0
    %1792 = vmatpush1.msra.mxu0 0.0
    %1793 = vmatprep.subr.mxu0 0.0
    %1794 = vmatpush1.msra.mxu0 0.0
    %1795 = vmatprep.subr.mxu0 0.0
    %1796 = vmatpush1.msra.mxu0 0.0
    %1797 = vmatprep.subr.mxu0 0.0
    %1798 = vmatpush1.msra.mxu0 0.0
    %1799 = vmatprep.subr.mxu0 0.0
    %1800 = vmatpush1.msra.mxu0 0.0
    %1801 = vmatprep.subr.mxu0 0.0
    %1802 = vmatpush1.msra.mxu0 0.0
    %1803 = vmatprep.subr.mxu0 0.0
    %1804 = vmatpush1.msra.mxu0 0.0
    %1805 = vmatprep.subr.mxu0 0.0
    %1806 = vmatpush1.msra.mxu0 0.0
    %1807 = vmatprep.subr.mxu0 0.0
    %1808 = vmatpush1.msra.mxu0 0.0
    %1809 = vmatprep.subr.mxu0 0.0
    %1810 = vmatpush1.msra.mxu0 0.0
    %1811 = vmatprep.subr.mxu0 0.0
    %1812 = vmatpush1.msra.mxu0 0.0
    %1813 = vmatprep.subr.mxu0 0.0
    %1814 = vmatpush1.msra.mxu0 0.0
    %1815 = vmatprep.subr.mxu0 0.0
    %1816 = vmatpush1.msra.mxu0 0.0
    %1817 = vmatprep.subr.mxu0 0.0
    %1818 = vmatpush1.msra.mxu0 0.0
    %1819 = vmatprep.subr.mxu0 0.0
    %1820 = vmatpush1.msra.mxu0 0.0
    %1821 = vmatprep.subr.mxu0 0.0
    %1822 = vmatpush1.msra.mxu0 0.0
    %1823 = vmatprep.subr.mxu0 0.0
    %1824 = vmatpush1.msra.mxu0 0.0
    %1825 = vmatprep.subr.mxu0 0.0
    %1826 = vmatpush1.msra.mxu0 0.0
    %1827 = vmatprep.subr.mxu0 0.0
    %1828 = vmatpush1.msra.mxu0 0.0
    %1829 = vmatprep.subr.mxu0 0.0
    %1830 = vmatpush1.msra.mxu0 0.0
    %1831 = vmatprep.subr.mxu0 0.0
    %1832 = vmatpush1.msra.mxu0 0.0
    %1833 = vmatprep.subr.mxu0 0.0
    %1834 = vmatpush1.msra.mxu0 0.0
    %1835 = vmatprep.subr.mxu0 0.0
    %1836 = vmatpush1.msra.mxu0 0.0
    %1837 = vmatprep.subr.mxu0 0.0
    %1838 = vmatpush1.msra.mxu0 0.0
    %1839 = vmatprep.subr.mxu0 0.0
    %1840 = vmatpush1.msra.mxu0 0.0
    %1841 = vmatprep.subr.mxu0 0.0
    %1842 = vmatpush1.msra.mxu0 0.0
    %1843 = vmatprep.subr.mxu0 0.0
    %1844 = vmatpush1.msra.mxu0 0.0
    %1845 = vmatprep.subr.mxu0 0.0
    %1846 = vmatpush1.msra.mxu0 0.0
    %1847 = vmatprep.subr.mxu0 0.0
    %1848 = vmatpush1.msra.mxu0 0.0
    %1849 = vmatprep.subr.mxu0 0.0
    %1850 = vmatpush1.msra.mxu0 0.0
    %1851 = vmatprep.mubr.f32.mxu0 0.0
    %1852 = vmatmul.mubr.f32.gmra.mrb[0].mxu0 %v1779
    %v1853 = vpop.f32.mrb[0].mxu0
    %v1854 = vadd.f32 %v1762, %v1853
    %v1855 = vpop.f32.mrb[0].mxu0
    %1856 = vmatprep.mubr.f32.mxu0 0.0
    %1857 = vmatmul.mubr.f32.gmra.mrb[0].mxu0 %v1781
    %v1858 = vpop.f32.mrb[0].mxu0
    %v1859 = vadd.f32 %v1767, %v1858
    %v1860 = vpop.f32.mrb[0].mxu0
    %1861 = vmatprep.mubr.f32.mxu0 0.0
    %1862 = vmatmul.mubr.f32.gmra.mrb[0].mxu0 %v1783
    %v1863 = vpop.f32.mrb[0].mxu0
    %v1864 = vadd.f32 %v1772, %v1863
    %v1865 = vpop.f32.mrb[0].mxu0
    %1866 = vmatprep.mubr.f32.mxu0 0.0
    %1867 = vmatmul.mubr.f32.gmra.mrb[0].mxu0 %v1785
    %v1868 = vpop.f32.mrb[0].mxu0
    %v1869 = vadd.f32 %v1777, %v1868
    %v1870 = vpop.f32.mrb[0].mxu0
    %1871 = vdwg.mxu0
    %v1872 = vmax.f32 %v1854, 0.0
    %v1873 = vmax.f32 %v1859, 0.0
    %v1874 = vmax.f32 %v1864, 0.0
    %v1875 = vmax.f32 %v1869, 0.0
    %v1876 = vmul.f32 %v1872, %v44
    %v1877 = vmul.f32 %v1873, %v44
    %v1878 = vmul.f32 %v1874, %v44
    %v1879 = vmul.f32 %v1875, %v44
    %v1880 = vsel %vm632, %v1876, 0.0
    %1881 = vadd.xlane.f32.xlu0 %v1880
    %v1882 = vpop.xlane.xlu0 %1881
    %v1883 = vsel %vm632, %v1877, 0.0
    %1884 = vadd.xlane.f32.xlu0 %v1883
    %v1885 = vpop.xlane.xlu0 %1884
    %v1886 = vsel %vm632, %v1878, 0.0
    %1887 = vadd.xlane.f32.xlu0 %v1886
    %v1888 = vpop.xlane.xlu0 %1887
    %v1889 = vsel %vm632, %v1879, 0.0
    %1890 = vadd.xlane.f32.xlu0 %v1889
    %v1891 = vpop.xlane.xlu0 %1890
    %v1892 = vmul.f32 %v1872, %v1872
    %v1893 = vmul.f32 %v1873, %v1873
    %v1894 = vmul.f32 %v1874, %v1874
    %v1895 = vmul.f32 %v1875, %v1875
    %v1896 = vmul.f32 %v1892, %v44
    %v1897 = vmul.f32 %v1893, %v44
    %v1898 = vmul.f32 %v1894, %v44
    %v1899 = vmul.f32 %v1895, %v44
    %v1900 = vsel %vm632, %v1896, 0.0
    %1901 = vadd.xlane.f32.xlu0 %v1900
    %v1902 = vpop.xlane.xlu0 %1901
    %v1903 = vsel %vm632, %v1897, 0.0
    %1904 = vadd.xlane.f32.xlu0 %v1903
    %v1905 = vpop.xlane.xlu0 %1904
    %v1906 = vsel %vm632, %v1898, 0.0
    %1907 = vadd.xlane.f32.xlu0 %v1906
    %v1908 = vpop.xlane.xlu0 %1907
    %v1909 = vsel %vm632, %v1899, 0.0
    %1910 = vadd.xlane.f32.xlu0 %v1909
    %v1911 = vpop.xlane.xlu0 %1910
    %v1912 = vmul.f32 %v1882, 0.5
    %v1913 = vmul.f32 %v1885, 0.5
    %v1914 = vmul.f32 %v1888, 0.5
    %v1915 = vmul.f32 %v1891, 0.5
    %v1916 = vmul.f32 %v1902, 0.5
    %v1917 = vmul.f32 %v1905, 0.5
    %v1918 = vmul.f32 %v1908, 0.5
    %v1919 = vmul.f32 %v1911, 0.5
    %v1920 = vmul.f32 %v1912, %v1912
    %v1921 = vmul.f32 %v1913, %v1913
    %v1922 = vmul.f32 %v1914, %v1914
    %v1923 = vmul.f32 %v1915, %v1915
    %v1924 = vsub.f32 %v1916, %v1920
    %v1925 = vsub.f32 %v1917, %v1921
    %v1926 = vsub.f32 %v1918, %v1922
    %v1927 = vsub.f32 %v1919, %v1923
    %v1928 = vmax.f32 %v1924, 0.0
    %v1929 = vmax.f32 %v1925, 0.0
    %v1930 = vmax.f32 %v1926, 0.0
    %v1931 = vmax.f32 %v1927, 0.0
    %v1932 = vsub.f32 %v1872, %v1912
    %v1933 = vsub.f32 %v1873, %v1913
    %v1934 = vsub.f32 %v1874, %v1914
    %v1935 = vsub.f32 %v1875, %v1915
    %v1936 = vadd.f32 %v1928, 1e-05
    %v1937 = vadd.f32 %v1929, 1e-05
    %v1938 = vadd.f32 %v1930, 1e-05
    %v1939 = vadd.f32 %v1931, 1e-05
    %v1940 = vrsqrt.pop %v1936
    %v1941 = vrsqrt.pop %v1937
    %v1942 = vrsqrt.pop %v1938
    %v1943 = vrsqrt.pop %v1939
    %v1944 = vmul.f32 %v1932, %v1940
    %v1945 = vmul.f32 %v1933, %v1941
    %v1946 = vmul.f32 %v1934, %v1942
    %v1947 = vmul.f32 %v1935, %v1943
    %v1948 = vld [vmem:[#allocation3 + $0x130] sm:$0x7]
    %1950 = vset.pattern.permute.xlu0 32
    %1951 = vperm.xlu0 %1950, %v1948
    %v1952 = vpop.permute.xlu0 %1951
    %v1954 = vsel %vm941, %v1948, 0
    %1956 = vmatprep.subr.mxu0 0.0
    %1957 = vmatpush1.msra.mxu0 %v1944
    %1958 = vmatprep.subr.mxu0 0.0
    %1959 = vmatpush1.msra.mxu0 %v1945
    %1960 = vmatprep.subr.mxu0 0.0
    %1961 = vmatpush1.msra.mxu0 %v1946
    %1962 = vmatprep.subr.mxu0 0.0
    %1963 = vmatpush1.msra.mxu0 %v1947
    %1964 = vmatprep.subr.mxu0 0.0
    %1965 = vmatpush1.msra.mxu0 0.0
    %1966 = vmatprep.subr.mxu0 0.0
    %1967 = vmatpush1.msra.mxu0 0.0
    %1968 = vmatprep.subr.mxu0 0.0
    %1969 = vmatpush1.msra.mxu0 0.0
    %1970 = vmatprep.subr.mxu0 0.0
    %1971 = vmatpush1.msra.mxu0 0.0
    %1972 = vmatprep.subr.mxu0 0.0
    %1973 = vmatpush1.msra.mxu0 0.0
    %1974 = vmatprep.subr.mxu0 0.0
    %1975 = vmatpush1.msra.mxu0 0.0
    %1976 = vmatprep.subr.mxu0 0.0
    %1977 = vmatpush1.msra.mxu0 0.0
    %1978 = vmatprep.subr.mxu0 0.0
    %1979 = vmatpush1.msra.mxu0 0.0
    %1980 = vmatprep.subr.mxu0 0.0
    %1981 = vmatpush1.msra.mxu0 0.0
    %1982 = vmatprep.subr.mxu0 0.0
    %1983 = vmatpush1.msra.mxu0 0.0
    %1984 = vmatprep.subr.mxu0 0.0
    %1985 = vmatpush1.msra.mxu0 0.0
    %1986 = vmatprep.subr.mxu0 0.0
    %1987 = vmatpush1.msra.mxu0 0.0
    %1988 = vmatprep.subr.mxu0 0.0
    %1989 = vmatpush1.msra.mxu0 0.0
    %1990 = vmatprep.subr.mxu0 0.0
    %1991 = vmatpush1.msra.mxu0 0.0
    %1992 = vmatprep.subr.mxu0 0.0
    %1993 = vmatpush1.msra.mxu0 0.0
    %1994 = vmatprep.subr.mxu0 0.0
    %1995 = vmatpush1.msra.mxu0 0.0
    %1996 = vmatprep.subr.mxu0 0.0
    %1997 = vmatpush1.msra.mxu0 0.0
    %1998 = vmatprep.subr.mxu0 0.0
    %1999 = vmatpush1.msra.mxu0 0.0
    %2000 = vmatprep.subr.mxu0 0.0
    %2001 = vmatpush1.msra.mxu0 0.0
    %2002 = vmatprep.subr.mxu0 0.0
    %2003 = vmatpush1.msra.mxu0 0.0
    %2004 = vmatprep.subr.mxu0 0.0
    %2005 = vmatpush1.msra.mxu0 0.0
    %2006 = vmatprep.subr.mxu0 0.0
    %2007 = vmatpush1.msra.mxu0 0.0
    %2008 = vmatprep.subr.mxu0 0.0
    %2009 = vmatpush1.msra.mxu0 0.0
    %2010 = vmatprep.subr.mxu0 0.0
    %2011 = vmatpush1.msra.mxu0 0.0
    %2012 = vmatprep.subr.mxu0 0.0
    %2013 = vmatpush1.msra.mxu0 0.0
    %2014 = vmatprep.subr.mxu0 0.0
    %2015 = vmatpush1.msra.mxu0 0.0
    %2016 = vmatprep.subr.mxu0 0.0
    %2017 = vmatpush1.msra.mxu0 0.0
    %2018 = vmatprep.subr.mxu0 0.0
    %2019 = vmatpush1.msra.mxu0 0.0
    %2020 = vmatprep.mubr.f32.mxu0 0.0
    %2021 = vmatmul.mubr.f32.gmra.mrb[0].mxu0 %v1954
    %v2022 = vpop.f32.mrb[0].mxu0
    %v2023 = vadd.f32 %v1952, %v2022
    %v2024 = vpop.f32.mrb[0].mxu0
    %2025 = vdwg.mxu0
    %vm2026 = vcmask 59392
    %v2027 = vsel %vm2026, %v2023, -inf
    %v2028 = vrot.slane %v2027, 4
    %v2029 = vmax.f32 %v2027, %v2028
    %v2030 = vrot.slane %v2029, 2
    %v2031 = vmax.f32 %v2029, %v2030
    %v2032 = vrot.slane %v2031, 1
    %v2033 = vmax.f32 %v2031, %v2032
    %v2034 = vsub.f32 %v2023, %v2033
    %v2035 = vmul.f32 %v2034, 1.442695
    %v2036 = vpow.pop %v2035
    %v2037 = vsel %vm2026, %v2036, 0.0
    %v2038 = vrot.slane %v2037, 4
    %v2039 = vadd.f32 %v2037, %v2038
    %v2040 = vrot.slane %v2039, 2
    %v2041 = vadd.f32 %v2039, %v2040
    %v2042 = vrot.slane %v2041, 1
    %v2043 = vadd.f32 %v2041, %v2042
    %v2044 = vrcp.pop %v2043
    %v2045 = vmul.f32 %v2036, %v2044
    %2046 = vst.msk [vmem:[%s4] sm:$0xff] %vm632, %v1747
    %2047 = vst.msk [vmem:[%s4 + $0x8] sm:$0xff] %vm632, %v1752
    %2048 = vst.msk [vmem:[%s5] sm:$0x7] %vm2026, %v2045
    // Predicated region
    $region22: #{pretrain_model_forward.1} parent=1 // pred_check
      _
    $region23: #{pretrain_model_forward.1} parent=1 // pred_check_branch
      %2050 = sbr.rel (0) target = $region25
    $region24: #{pretrain_model_forward.1} parent=1 // pred_region
      _
    $region25: #{pretrain_model_forward.1} parent=1 // pred_fallthru
      _
    // Predicated region
    $region26: #{pretrain_model_forward.1} parent=1 // pred_check
      _
    $region27: #{pretrain_model_forward.1} parent=1 // pred_check_branch
      %2052 = sbr.rel (0) target = $region29
    $region28: #{pretrain_model_forward.1} parent=1 // pred_region
      _
    $region29: #{pretrain_model_forward.1} parent=1 // pred_fallthru
      _
    // Predicated region
    $region30: #{pretrain_model_forward.1} parent=1 // pred_check
      _
    $region31: #{pretrain_model_forward.1} parent=1 // pred_check_branch
      %2054 = sbr.rel (0) target = $region33
    $region32: #{pretrain_model_forward.1} parent=1 // pred_region
      _
    $region33: #{pretrain_model_forward.1} parent=1 // pred_fallthru
      _
    // Predicated region
    $region34: #{pretrain_model_forward.1} parent=1 // pred_check
      _
    $region35: #{pretrain_model_forward.1} parent=1 // pred_check_branch
      %2056 = sbr.rel (0) target = $region37
    $region36: #{pretrain_model_forward.1} parent=1 // pred_region
      _
    $region37: #{pretrain_model_forward.1} parent=1 // pred_fallthru
      _
    %2057 = vsyncpa [#allocation4], 1

</llo_original>
